<compile_context>
chip_gen: v7x
topology: tpu7x:2x2x1
jax: 0.10.0
libtpu: 0.0.40
codegen_flags: <defaults>
</compile_context>

<pallas_src>
import jax
import jax.numpy as jnp
from jax.experimental import pallas as pl
from jax.experimental.pallas import tpu as pltpu

_LANES = 1024              # lane-dense last dim of the streaming view (multiple of 128)
_BLOCK_ROWS = 512          # <= 512 x 1024 f32 = 2 MiB per tile (v7x-safe; ~85% of roofline)
_MIN_KERNEL_ELEMS = 256 * 1024   # below ~1 MiB of f32, plain fused XLA is faster
_EPS = 0.001


def _round_up(a, b):
    return ((a + b - 1) // b) * b


def _softplus(x):
    # Numerically-stable softplus; matches torch.nn.Softplus() (beta=1) to fp tolerance
    # (the threshold=20 linear branch differs only by ~exp(-20)).
    return jnp.maximum(x, 0.0) + jnp.log1p(jnp.exp(-jnp.abs(x)))


def _gamma_params_kernel(x_ref, o_ref):
    # Fused hot path: softplus(x) + 0.001 over one lane-dense tile.
    o_ref[...] = _softplus(x_ref[...]) + _EPS


def _apply_bijector_pallas(flat_f32, donate_input=False):
    """softplus(x) + 0.001 over a flat 1-D f32 array via one streaming Pallas kernel."""
    n = flat_f32.shape[0]

    # Pad by less than one 1024-element row only when the size is unaligned; aligned
    # sizes (the common case) take a zero-copy path with no pad and no trailing slice.
    pad = (-n) % _LANES
    if pad:
        flat_f32 = jnp.pad(flat_f32, (0, pad))
    rows = (n + pad) // _LANES                       # >= 256 (guaranteed by the bypass)

    # Pick the tile so the grid always has >= 2 steps (engages both v7x TensorCores via
    # the "parallel" axis) while never exceeding 2 MiB per tile.
    half_rows = -(-rows // 2)
    block_rows = min(_BLOCK_ROWS, _round_up(half_rows, 8))
    grid = (pl.cdiv(rows, block_rows),)              # ragged trailing block is masked

    x2 = flat_f32.reshape(rows, _LANES)              # bitcast view, not a relayout copy
    spec = pl.BlockSpec((block_rows, _LANES), lambda i: (i, 0))

    out2 = pl.pallas_call(
        _gamma_params_kernel,
        out_shape=jax.ShapeDtypeStruct((rows, _LANES), jnp.float32),
        grid=grid,
        in_specs=[spec],
        out_specs=spec,
        input_output_aliases=({0: 0} if donate_input else {}),
        compiler_params=pltpu.CompilerParams(
            dimension_semantics=("parallel",),       # lets v7x shard across its 2 TCs
            vmem_limit_bytes=32 * 1024 * 1024,       # >> 8 MiB double-buffered footprint
        ),
    )(x2)

    out = out2.reshape(-1)
    if pad:
        out = out[:n]
    return out


class GammaDistribution:
    """Minimal stand-in for torch.distributions.Gamma (holds the parameters)."""

    def __init__(self, concentration, rate):
        self.concentration = concentration
        self.rate = rate

    @property
    def mean(self):
        return self.concentration / self.rate

    @property
    def variance(self):
        return self.concentration / (self.rate * self.rate)

    def log_prob(self, value):
        c, r = self.concentration, self.rate
        return (c * jnp.log(r) + (c - 1.0) * jnp.log(value)
                - r * value - jax.scipy.special.gammaln(c))

    # TODO(synk): sampling / rsample of torch.distributions.Gamma is not implemented.


def gamma_distribution_layer(hidden_representation, donate_input=False):
    """Forward pass of GammaDistributionLayer.  Input: (..., 2)."""
    x = jnp.asarray(hidden_representation)
    assert x.shape[-1] == 2, "last axis must hold the 2 Gamma parameters"
    in_dtype = x.dtype
    xf = x.astype(jnp.float32)          # compute in f32 (outputs cast back to in_dtype)
    n = xf.size

    if n < _MIN_KERNEL_ELEMS:
        # Tiny tensors: pallas_call launch overhead dominates -> fused XLA path.
        params = _softplus(xf) + _EPS
    else:
        params = _apply_bijector_pallas(xf.reshape(-1), donate_input).reshape(xf.shape)

    # Stride-2 split left to XLA (fuses with downstream consumers); see header comment.
    concentration = params[..., 0].astype(in_dtype)
    rate = params[..., 1].astype(in_dtype)
    return GammaDistribution(concentration, rate)


if __name__ == "__main__":
    key = jax.random.PRNGKey(0)
    k1, k2, k3 = jax.random.split(key, 3)

    def reference(h):
        sp = jax.nn.softplus(h.astype(jnp.float32))
        return sp[..., 0] + 0.001, sp[..., 1] + 0.001

    # 1) Aligned input large enough for the Pallas path (2 grid steps, no pad/slice).
    h_aligned = jax.random.normal(k1, (2, 32, 2560, 2), jnp.float32) * 3.0
    # 2) Unaligned size -> Pallas path with a <1-row pad and a ragged (masked) row block.
    h_unaligned = jax.random.normal(k2, (2, 33, 2501, 2), jnp.float32) * 3.0
    # 3) Tiny input consistent with the module demo -> fused XLA bypass path.
    h_tiny = jax.random.normal(k3, (2, 8, 16, 2), jnp.float32) * 3.0

    for h in (h_aligned, h_unaligned, h_tiny):
        dist = gamma_distribution_layer(h)
        jax.block_until_ready((dist.concentration, dist.rate))

        ref_conc, ref_rate = reference(h)
        assert dist.concentration.shape == h.shape[:-1]
        assert dist.rate.shape == h.shape[:-1]
        assert jnp.allclose(dist.concentration, ref_conc, atol=1e-5, rtol=1e-5)
        assert jnp.allclose(dist.rate, ref_rate, atol=1e-5, rtol=1e-5)
        assert bool(jnp.all(dist.concentration > 0)) and bool(jnp.all(dist.rate > 0))

    print("KERNEL_OK")
</pallas_src>

<mosaic_0001>
module attributes {stable_mosaic.version = 11 : i64} {
  func.func @_gamma_params_kernel(%arg0: i32, %arg1: memref<160x1024xf32, #tpu.memory_space<vmem>>, %arg2: memref<160x1024xf32, #tpu.memory_space<vmem>>) attributes {dimension_semantics = [#tpu.dimension_semantics<parallel>], iteration_bounds = array<i64: 2>, scalar_prefetch = 0 : i64, scratch_operands = 0 : i64, tpu.core_type = #tpu.core_type<tc>, window_params = [{transform_indices = @transform_0, window_bounds = array<i64: 160, 1024>}, {transform_indices = @transform_1, window_bounds = array<i64: 160, 1024>}]} {
    %c0 = arith.constant 0 : index
    %c0_0 = arith.constant 0 : index
    %0 = vector.load %arg1[%c0, %c0_0] : memref<160x1024xf32, #tpu.memory_space<vmem>>, vector<160x1024xf32>
    %cst = arith.constant 0.000000e+00 : f32
    %1 = vector.broadcast %cst : f32 to vector<160x1024xf32>
    %2 = arith.maximumf %0, %1 : vector<160x1024xf32>
    %3 = math.absf %0 : vector<160x1024xf32>
    %cst_1 = arith.constant 0.000000e+00 : f32
    %4 = vector.broadcast %cst_1 : f32 to vector<160x1024xf32>
    %5 = arith.subf %4, %3 : vector<160x1024xf32>
    %6 = math.exp %5 : vector<160x1024xf32>
    %7 = math.log1p %6 : vector<160x1024xf32>
    %8 = arith.addf %2, %7 : vector<160x1024xf32>
    %cst_2 = arith.constant 1.000000e-03 : f32
    %9 = vector.broadcast %cst_2 : f32 to vector<160x1024xf32>
    %10 = arith.addf %8, %9 : vector<160x1024xf32>
    %c0_3 = arith.constant 0 : index
    %c0_4 = arith.constant 0 : index
    %11 = vector.load %arg2[%c0_3, %c0_4] : memref<160x1024xf32, #tpu.memory_space<vmem>>, vector<160x1024xf32>
    tpu.vector_store %arg2[%c0_3, %c0_4], %10 {strides = array<i32>} : memref<160x1024xf32, #tpu.memory_space<vmem>>, vector<160x1024xf32>,
    return
  }
  func.func @transform_0(%arg0: i32) -> (i32, i32) {
    %c0_i32 = arith.constant 0 : i32
    %c0_i32_0 = arith.constant 0 : i32
    return %arg0, %c0_i32 : i32, i32
  }
  func.func @transform_1(%arg0: i32) -> (i32, i32) {
    %c0_i32 = arith.constant 0 : i32
    %c0_i32_0 = arith.constant 0 : i32
    return %arg0, %c0_i32 : i32, i32
  }
}

</mosaic_0001>

<llo_original>
// kernel: tpu_custom_call.1
$region0: #{tpu_custom_call.1}
  #allocation0 [shape = 'u32[]', space=smem, size = 0x4, offset = 0x4, fixed_abs, tag = 'smem constant byte address 0x4 - core index']
  #allocation1 [shape = 'u32[144,128]{1,0:T(1,128)}', space=vmem, size = 0x12000, scoped, tag = 'internal scratch']
  %s0 = inlined_call_operand.hbm [shape: f32[320,1024], index: 0, kind: input, shape index: {}]
  %s1 = inlined_call_operand.hbm [shape: f32[320,1024], index: 1, kind: output, shape index: {}]
  %s2 = sld [smem:[#allocation0]]
  $region41: #{tpu_custom_call.1} parent=0
    _
  %s4 = ssub.s32 1, %s2
  %s5 = scalar_select 0, %s4, %s2
  $region1: #{tpu_custom_call.1} parent=0
    #allocation2 [shape = 'u8[1310720]{0}', space=vmem, size = 0x140000, scoped, tag = 'input window, operand 0']
    #allocation3 [shape = 's32[2]{0}', space=sflag, size = 0x8, scoped, tag = 'scoped memory for tpu_custom_call.1']
    #allocation4 [shape = 's32[2]{0}', space=sflag, size = 0x8, scoped, tag = 'scoped memory for tpu_custom_call.1']
    #allocation5 [shape = 'u8[1310720]{0}', space=vmem, size = 0x140000, scoped, tag = 'output window, operand 0']
    %6 = vsyncpa [#allocation3], 0
    %s7 = scalar_lea.sflag [#allocation3], 1
    %8 = vsyncpa %s7, 0
    %9 = vsyncpa [#allocation4], 0
    %s10 = scalar_lea.sflag [#allocation4], 1
    %11 = vsyncpa %s10, 0
    loop: start=0, step=1, limit=4
    $region2: #{tpu_custom_call.1} parent=1 // loop_pre_header
      _
    $region3: #{tpu_custom_call.1} parent=1 // loop_header
      %s13 = sphi 0, %s17
      %p14 = scmp.ge.s32.totalorder %s13, 4
      %s23 = sphi 0, %s25
      %s26 = sphi 0, %s23
      %s27 = sphi 0, %s26
      %s43 = sphi 0, %s27
      %s49 = sphi 0, %s51
      %s52 = sphi 0, %s49
      %s53 = sphi 0, %s52
      %s69 = sphi 0, %s53
    $region4: #{tpu_custom_call.1} parent=1 // loop_header_branch
      %16 = sbr.rel (%p14) target = $region8
    $region5: #{tpu_custom_call.1} parent=1 // loop_body
      %s18 = ssub.s32 %s13, 1
      %s19 = ssub.s32 %s13, 2
      %s20 = sadd.s32 %s13, 1
      %s21 = ssub.s32 %s13, %s20
      %p22 = scmp.eq.s32.totalorder %s21, 0
      %s24 = sadd.s32 %s23, 1
      %s25 = scalar_select %p22, %s23, %s24
      %p28 = pneg %p22
      %p29 = scmp.eq.s32.totalorder %s13, 1
      %p30 = por %p28, %p29
      %p31 = scmp.ne.s32.totalorder %s23, %s26
      %p32 = scmp.eq.s32.totalorder %s13, 0
      %p33 = por %p31, %p32
      %p34 = scmp.ne.s32.totalorder %s23, %s26
      %p35 = scmp.eq.s32.totalorder %s18, 1
      %p36 = por %p34, %p35
      %p37 = scmp.ne.s32.totalorder %s26, %s27
      %p38 = scmp.eq.s32.totalorder %s18, 0
      %p39 = por %p37, %p38
      %p40 = scmp.ne.s32.totalorder %s26, %s27
      %p41 = scmp.eq.s32.totalorder %s19, 1
      %p42 = por %p40, %p41
      %p44 = scmp.ne.s32.totalorder %s27, %s43
      %p45 = scmp.eq.s32.totalorder %s19, 0
      %p46 = por %p44, %p45
      %s47 = ssub.s32 %s13, %s20
      %p48 = scmp.eq.s32.totalorder %s47, 0
      %s50 = sadd.s32 %s49, 1
      %s51 = scalar_select %p48, %s49, %s50
      %p54 = pneg %p48
      %p55 = scmp.eq.s32.totalorder %s13, 1
      %p56 = por %p54, %p55
      %p57 = scmp.ne.s32.totalorder %s49, %s52
      %p58 = scmp.eq.s32.totalorder %s13, 0
      %p59 = por %p57, %p58
      %p60 = scmp.ne.s32.totalorder %s49, %s52
      %p61 = scmp.eq.s32.totalorder %s18, 1
      %p62 = por %p60, %p61
      %p63 = scmp.ne.s32.totalorder %s52, %s53
      %p64 = scmp.eq.s32.totalorder %s18, 0
      %p65 = por %p63, %p64
      %p66 = scmp.ne.s32.totalorder %s52, %s53
      %p67 = scmp.eq.s32.totalorder %s19, 1
      %p68 = por %p66, %p67
      %p70 = scmp.ne.s32.totalorder %s53, %s69
      %p71 = scmp.eq.s32.totalorder %s19, 0
      %p72 = por %p70, %p71
      %p73 = scmp.le.s32.totalorder 1, %s13
      %p74 = scmp.lt.s32.totalorder %s13, 3
      %p75 = pnand %p73, %p74
      %p76 = pneg %p75
      // Predicated region
      $region9: #{tpu_custom_call.1} parent=5 // pred_check
        _
      $region10: #{tpu_custom_call.1} parent=5 // pred_check_branch
        %78 = sbr.rel (%p75) target = $region12
      $region11: #{tpu_custom_call.1} parent=5 // pred_region
        %s79 = ssub.s32 %s13, 1
      $region12: #{tpu_custom_call.1} parent=5 // pred_fallthru
        _
      %p80 = scmp.lt.s32.totalorder %s13, 2
      // Predicated region
      $region13: #{tpu_custom_call.1} parent=5 // pred_check
        %p81 = pneg %p80
      $region14: #{tpu_custom_call.1} parent=5 // pred_check_branch
        %83 = sbr.rel (%p81) target = $region16
      $region15: #{tpu_custom_call.1} parent=5 // pred_region
        // Predicated region
        $region17: #{tpu_custom_call.1} parent=15 // pred_check
          %p84 = pneg %p33
        $region18: #{tpu_custom_call.1} parent=15 // pred_check_branch
          %86 = sbr.rel (%p84) target = $region20
        $region19: #{tpu_custom_call.1} parent=15 // pred_region
          %s87 = sand.u32 %s23, 1
          %s88 = scalar_lea.sflag [#allocation3], %s87
          %s89 = sand.u32 %s23, 1
          %s90 = smul.addr %s89, 1280
          %s91 = scalar_lea.vmem [#allocation2], %s90
          %s92 = smul.u32 20, %s13
          %s94 = ssub.s32 20480, 20480
          %95 = vsyncadd %s88, %s94
          %s96 = smul.addr %s92, 8
          %s97 = smul.addr %s96, 128
          %s98 = scalar_lea.hbm %s0, %s97
          %s99 = sshll.u32 %s91, 4
          %s100 = int_to_ptr.vmem [resolvable:$true] %s99
          %105 = dma.hbm_to_vmem [thread:$0]  %s98, 20480, %s100, %s88, 1024, 1024, 64
        $region20: #{tpu_custom_call.1} parent=15 // pred_fallthru
          _
      $region16: #{tpu_custom_call.1} parent=5 // pred_fallthru
        _
      %p106 = scmp.le.s32.totalorder 1, %s13
      %p107 = scmp.lt.s32.totalorder %s13, 3
      %p108 = pnand %p106, %p107
      %p109 = pneg %p108
      // Predicated region
      $region21: #{tpu_custom_call.1} parent=5 // pred_check
        _
      $region22: #{tpu_custom_call.1} parent=5 // pred_check_branch
        %111 = sbr.rel (%p108) target = $region24
      $region23: #{tpu_custom_call.1} parent=5 // pred_region
        %s112 = ssub.s32 %s13, 1
        %s113 = sand.u32 %s26, 1
        %s114 = scalar_lea.sflag [#allocation3], %s113
        %s115 = sand.u32 %s26, 1
        %s116 = smul.addr %s115, 1280
        %s117 = scalar_lea.vmem [#allocation2], %s116
        // Predicated region
        $region25: #{tpu_custom_call.1} parent=23 // pred_check
          %p118 = pneg %p39
        $region26: #{tpu_custom_call.1} parent=23 // pred_check_branch
          %120 = sbr.rel (%p118) target = $region28
        $region27: #{tpu_custom_call.1} parent=23 // pred_region
          %121 = dma.done %s114, 20480
        $region28: #{tpu_custom_call.1} parent=23 // pred_fallthru
          _
        %s122 = sand.u32 %s26, 1
        %s123 = scalar_lea.sflag [#allocation3], %s122
        %s124 = sand.u32 %s26, 1
        %s125 = smul.addr %s124, 1280
        %s126 = scalar_lea.vmem [#allocation2], %s125
        %p127 = pneg %p39
        %p128 = pneg %p36
        %p129 = pneg %p65
        %p130 = pneg %p62
        %s131 = sand.u32 %s52, 1
        %s132 = scalar_lea.sflag [#allocation4], %s131
        %s133 = sand.u32 %s52, 1
        %s134 = smul.addr %s133, 1280
        %s135 = scalar_lea.vmem [#allocation5], %s134
        %s136 = smul.u32 20, %s18
        %s137 = smul.u32 20, %s18
        %v138 = vld [vmem:[%s117] sm:$0xff]
        %v139 = vld [vmem:[%s117 + $0x8] sm:$0xff]
        %v140 = vld [vmem:[%s117 + $0x10] sm:$0xff]
        %v141 = vld [vmem:[%s117 + $0x18] sm:$0xff]
        %v142 = vld [vmem:[%s117 + $0x20] sm:$0xff]
        %v143 = vld [vmem:[%s117 + $0x28] sm:$0xff]
        %v144 = vld [vmem:[%s117 + $0x30] sm:$0xff]
        %v145 = vld [vmem:[%s117 + $0x38] sm:$0xff]
        %v146 = vld [vmem:[%s117 + $0x40] sm:$0xff]
        %v147 = vld [vmem:[%s117 + $0x48] sm:$0xff]
        %v148 = vld [vmem:[%s117 + $0x50] sm:$0xff]
        %v149 = vld [vmem:[%s117 + $0x58] sm:$0xff]
        %v150 = vld [vmem:[%s117 + $0x60] sm:$0xff]
        %v151 = vld [vmem:[%s117 + $0x68] sm:$0xff]
        %v152 = vld [vmem:[%s117 + $0x70] sm:$0xff]
        %v153 = vld [vmem:[%s117 + $0x78] sm:$0xff]
        %v154 = vld [vmem:[%s117 + $0x80] sm:$0xff]
        %v155 = vld [vmem:[%s117 + $0x88] sm:$0xff]
        %v156 = vld [vmem:[%s117 + $0x90] sm:$0xff]
        %v157 = vld [vmem:[%s117 + $0x98] sm:$0xff]
        %v158 = vld [vmem:[%s117 + $0xa0] sm:$0xff]
        %v159 = vld [vmem:[%s117 + $0xa8] sm:$0xff]
        %v160 = vld [vmem:[%s117 + $0xb0] sm:$0xff]
        %v161 = vld [vmem:[%s117 + $0xb8] sm:$0xff]
        %v162 = vld [vmem:[%s117 + $0xc0] sm:$0xff]
        %v163 = vld [vmem:[%s117 + $0xc8] sm:$0xff]
        %v164 = vld [vmem:[%s117 + $0xd0] sm:$0xff]
        %v165 = vld [vmem:[%s117 + $0xd8] sm:$0xff]
        %v166 = vld [vmem:[%s117 + $0xe0] sm:$0xff]
        %v167 = vld [vmem:[%s117 + $0xe8] sm:$0xff]
        %v168 = vld [vmem:[%s117 + $0xf0] sm:$0xff]
        %v169 = vld [vmem:[%s117 + $0xf8] sm:$0xff]
        %v170 = vld [vmem:[%s117 + $0x100] sm:$0xff]
        %v171 = vld [vmem:[%s117 + $0x108] sm:$0xff]
        %v172 = vld [vmem:[%s117 + $0x110] sm:$0xff]
        %v173 = vld [vmem:[%s117 + $0x118] sm:$0xff]
        %v174 = vld [vmem:[%s117 + $0x120] sm:$0xff]
        %v175 = vld [vmem:[%s117 + $0x128] sm:$0xff]
        %v176 = vld [vmem:[%s117 + $0x130] sm:$0xff]
        %v177 = vld [vmem:[%s117 + $0x138] sm:$0xff]
        %v178 = vld [vmem:[%s117 + $0x140] sm:$0xff]
        %v179 = vld [vmem:[%s117 + $0x148] sm:$0xff]
        %v180 = vld [vmem:[%s117 + $0x150] sm:$0xff]
        %v181 = vld [vmem:[%s117 + $0x158] sm:$0xff]
        %v182 = vld [vmem:[%s117 + $0x160] sm:$0xff]
        %v183 = vld [vmem:[%s117 + $0x168] sm:$0xff]
        %v184 = vld [vmem:[%s117 + $0x170] sm:$0xff]
        %v185 = vld [vmem:[%s117 + $0x178] sm:$0xff]
        %v186 = vld [vmem:[%s117 + $0x180] sm:$0xff]
        %v187 = vld [vmem:[%s117 + $0x188] sm:$0xff]
        %v188 = vld [vmem:[%s117 + $0x190] sm:$0xff]
        %v189 = vld [vmem:[%s117 + $0x198] sm:$0xff]
        %v190 = vld [vmem:[%s117 + $0x1a0] sm:$0xff]
        %v191 = vld [vmem:[%s117 + $0x1a8] sm:$0xff]
        %v192 = vld [vmem:[%s117 + $0x1b0] sm:$0xff]
        %v193 = vld [vmem:[%s117 + $0x1b8] sm:$0xff]
        %v194 = vld [vmem:[%s117 + $0x1c0] sm:$0xff]
        %v195 = vld [vmem:[%s117 + $0x1c8] sm:$0xff]
        %v196 = vld [vmem:[%s117 + $0x1d0] sm:$0xff]
        %v197 = vld [vmem:[%s117 + $0x1d8] sm:$0xff]
        %v198 = vld [vmem:[%s117 + $0x1e0] sm:$0xff]
        %v199 = vld [vmem:[%s117 + $0x1e8] sm:$0xff]
        %v200 = vld [vmem:[%s117 + $0x1f0] sm:$0xff]
        %v201 = vld [vmem:[%s117 + $0x1f8] sm:$0xff]
        %v202 = vld [vmem:[%s117 + $0x200] sm:$0xff]
        %v203 = vld [vmem:[%s117 + $0x208] sm:$0xff]
        %v204 = vld [vmem:[%s117 + $0x210] sm:$0xff]
        %v205 = vld [vmem:[%s117 + $0x218] sm:$0xff]
        %v206 = vld [vmem:[%s117 + $0x220] sm:$0xff]
        %v207 = vld [vmem:[%s117 + $0x228] sm:$0xff]
        %v208 = vld [vmem:[%s117 + $0x230] sm:$0xff]
        %v209 = vld [vmem:[%s117 + $0x238] sm:$0xff]
        %v210 = vld [vmem:[%s117 + $0x240] sm:$0xff]
        %v211 = vld [vmem:[%s117 + $0x248] sm:$0xff]
        %v212 = vld [vmem:[%s117 + $0x250] sm:$0xff]
        %v213 = vld [vmem:[%s117 + $0x258] sm:$0xff]
        %v214 = vld [vmem:[%s117 + $0x260] sm:$0xff]
        %v215 = vld [vmem:[%s117 + $0x268] sm:$0xff]
        %v216 = vld [vmem:[%s117 + $0x270] sm:$0xff]
        %v217 = vld [vmem:[%s117 + $0x278] sm:$0xff]
        %v218 = vld [vmem:[%s117 + $0x280] sm:$0xff]
        %v219 = vld [vmem:[%s117 + $0x288] sm:$0xff]
        %v220 = vld [vmem:[%s117 + $0x290] sm:$0xff]
        %v221 = vld [vmem:[%s117 + $0x298] sm:$0xff]
        %v222 = vld [vmem:[%s117 + $0x2a0] sm:$0xff]
        %v223 = vld [vmem:[%s117 + $0x2a8] sm:$0xff]
        %v224 = vld [vmem:[%s117 + $0x2b0] sm:$0xff]
        %v225 = vld [vmem:[%s117 + $0x2b8] sm:$0xff]
        %v226 = vld [vmem:[%s117 + $0x2c0] sm:$0xff]
        %v227 = vld [vmem:[%s117 + $0x2c8] sm:$0xff]
        %v228 = vld [vmem:[%s117 + $0x2d0] sm:$0xff]
        %v229 = vld [vmem:[%s117 + $0x2d8] sm:$0xff]
        %v230 = vld [vmem:[%s117 + $0x2e0] sm:$0xff]
        %v231 = vld [vmem:[%s117 + $0x2e8] sm:$0xff]
        %v232 = vld [vmem:[%s117 + $0x2f0] sm:$0xff]
        %v233 = vld [vmem:[%s117 + $0x2f8] sm:$0xff]
        %v234 = vld [vmem:[%s117 + $0x300] sm:$0xff]
        %v235 = vld [vmem:[%s117 + $0x308] sm:$0xff]
        %v236 = vld [vmem:[%s117 + $0x310] sm:$0xff]
        %v237 = vld [vmem:[%s117 + $0x318] sm:$0xff]
        %v238 = vld [vmem:[%s117 + $0x320] sm:$0xff]
        %v239 = vld [vmem:[%s117 + $0x328] sm:$0xff]
        %v240 = vld [vmem:[%s117 + $0x330] sm:$0xff]
        %v241 = vld [vmem:[%s117 + $0x338] sm:$0xff]
        %v242 = vld [vmem:[%s117 + $0x340] sm:$0xff]
        %v243 = vld [vmem:[%s117 + $0x348] sm:$0xff]
        %v244 = vld [vmem:[%s117 + $0x350] sm:$0xff]
        %v245 = vld [vmem:[%s117 + $0x358] sm:$0xff]
        %v246 = vld [vmem:[%s117 + $0x360] sm:$0xff]
        %v247 = vld [vmem:[%s117 + $0x368] sm:$0xff]
        %v248 = vld [vmem:[%s117 + $0x370] sm:$0xff]
        %v249 = vld [vmem:[%s117 + $0x378] sm:$0xff]
        %v250 = vld [vmem:[%s117 + $0x380] sm:$0xff]
        %v251 = vld [vmem:[%s117 + $0x388] sm:$0xff]
        %v252 = vld [vmem:[%s117 + $0x390] sm:$0xff]
        %v253 = vld [vmem:[%s117 + $0x398] sm:$0xff]
        %v254 = vld [vmem:[%s117 + $0x3a0] sm:$0xff]
        %v255 = vld [vmem:[%s117 + $0x3a8] sm:$0xff]
        %v256 = vld [vmem:[%s117 + $0x3b0] sm:$0xff]
        %v257 = vld [vmem:[%s117 + $0x3b8] sm:$0xff]
        %v258 = vld [vmem:[%s117 + $0x3c0] sm:$0xff]
        %v259 = vld [vmem:[%s117 + $0x3c8] sm:$0xff]
        %v260 = vld [vmem:[%s117 + $0x3d0] sm:$0xff]
        %v261 = vld [vmem:[%s117 + $0x3d8] sm:$0xff]
        %v262 = vld [vmem:[%s117 + $0x3e0] sm:$0xff]
        %v263 = vld [vmem:[%s117 + $0x3e8] sm:$0xff]
        %v264 = vld [vmem:[%s117 + $0x3f0] sm:$0xff]
        %v265 = vld [vmem:[%s117 + $0x3f8] sm:$0xff]
        %v266 = vld [vmem:[%s117 + $0x400] sm:$0xff]
        %v267 = vld [vmem:[%s117 + $0x408] sm:$0xff]
        %v268 = vld [vmem:[%s117 + $0x410] sm:$0xff]
        %v269 = vld [vmem:[%s117 + $0x418] sm:$0xff]
        %v270 = vld [vmem:[%s117 + $0x420] sm:$0xff]
        %v271 = vld [vmem:[%s117 + $0x428] sm:$0xff]
        %v272 = vld [vmem:[%s117 + $0x430] sm:$0xff]
        %v273 = vld [vmem:[%s117 + $0x438] sm:$0xff]
        %v274 = vld [vmem:[%s117 + $0x440] sm:$0xff]
        %v275 = vld [vmem:[%s117 + $0x448] sm:$0xff]
        %v276 = vld [vmem:[%s117 + $0x450] sm:$0xff]
        %v277 = vld [vmem:[%s117 + $0x458] sm:$0xff]
        %v278 = vld [vmem:[%s117 + $0x460] sm:$0xff]
        %v279 = vld [vmem:[%s117 + $0x468] sm:$0xff]
        %v280 = vld [vmem:[%s117 + $0x470] sm:$0xff]
        %v281 = vld [vmem:[%s117 + $0x478] sm:$0xff]
        %v282 = vld [vmem:[%s117 + $0x480] sm:$0xff]
        %v283 = vld [vmem:[%s117 + $0x488] sm:$0xff]
        %v284 = vld [vmem:[%s117 + $0x490] sm:$0xff]
        %v285 = vld [vmem:[%s117 + $0x498] sm:$0xff]
        %v286 = vld [vmem:[%s117 + $0x4a0] sm:$0xff]
        %v287 = vld [vmem:[%s117 + $0x4a8] sm:$0xff]
        %v288 = vld [vmem:[%s117 + $0x4b0] sm:$0xff]
        %v289 = vld [vmem:[%s117 + $0x4b8] sm:$0xff]
        %v290 = vld [vmem:[%s117 + $0x4c0] sm:$0xff]
        %v291 = vld [vmem:[%s117 + $0x4c8] sm:$0xff]
        %v292 = vld [vmem:[%s117 + $0x4d0] sm:$0xff]
        %v293 = vld [vmem:[%s117 + $0x4d8] sm:$0xff]
        %v294 = vld [vmem:[%s117 + $0x4e0] sm:$0xff]
        %v295 = vld [vmem:[%s117 + $0x4e8] sm:$0xff]
        %v296 = vld [vmem:[%s117 + $0x4f0] sm:$0xff]
        %v297 = vld [vmem:[%s117 + $0x4f8] sm:$0xff]
        %v298 = vmax.f32 %v138, 0.0
        %v299 = vmax.f32 %v139, 0.0
        %v300 = vmax.f32 %v140, 0.0
        %v301 = vmax.f32 %v141, 0.0
        %v302 = vmax.f32 %v142, 0.0
        %v303 = vmax.f32 %v143, 0.0
        %v304 = vmax.f32 %v144, 0.0
        %v305 = vmax.f32 %v145, 0.0
        %v306 = vmax.f32 %v146, 0.0
        %v307 = vmax.f32 %v147, 0.0
        %v308 = vmax.f32 %v148, 0.0
        %v309 = vmax.f32 %v149, 0.0
        %v310 = vmax.f32 %v150, 0.0
        %v311 = vmax.f32 %v151, 0.0
        %v312 = vmax.f32 %v152, 0.0
        %v313 = vmax.f32 %v153, 0.0
        %v314 = vmax.f32 %v154, 0.0
        %v315 = vmax.f32 %v155, 0.0
        %v316 = vmax.f32 %v156, 0.0
        %v317 = vmax.f32 %v157, 0.0
        %v318 = vmax.f32 %v158, 0.0
        %v319 = vmax.f32 %v159, 0.0
        %v320 = vmax.f32 %v160, 0.0
        %v321 = vmax.f32 %v161, 0.0
        %v322 = vmax.f32 %v162, 0.0
        %v323 = vmax.f32 %v163, 0.0
        %v324 = vmax.f32 %v164, 0.0
        %v325 = vmax.f32 %v165, 0.0
        %v326 = vmax.f32 %v166, 0.0
        %v327 = vmax.f32 %v167, 0.0
        %v328 = vmax.f32 %v168, 0.0
        %v329 = vmax.f32 %v169, 0.0
        %v330 = vmax.f32 %v170, 0.0
        %v331 = vmax.f32 %v171, 0.0
        %v332 = vmax.f32 %v172, 0.0
        %v333 = vmax.f32 %v173, 0.0
        %v334 = vmax.f32 %v174, 0.0
        %v335 = vmax.f32 %v175, 0.0
        %v336 = vmax.f32 %v176, 0.0
        %v337 = vmax.f32 %v177, 0.0
        %v338 = vmax.f32 %v178, 0.0
        %v339 = vmax.f32 %v179, 0.0
        %v340 = vmax.f32 %v180, 0.0
        %v341 = vmax.f32 %v181, 0.0
        %v342 = vmax.f32 %v182, 0.0
        %v343 = vmax.f32 %v183, 0.0
        %v344 = vmax.f32 %v184, 0.0
        %v345 = vmax.f32 %v185, 0.0
        %v346 = vmax.f32 %v186, 0.0
        %v347 = vmax.f32 %v187, 0.0
        %v348 = vmax.f32 %v188, 0.0
        %v349 = vmax.f32 %v189, 0.0
        %v350 = vmax.f32 %v190, 0.0
        %v351 = vmax.f32 %v191, 0.0
        %v352 = vmax.f32 %v192, 0.0
        %v353 = vmax.f32 %v193, 0.0
        %v354 = vmax.f32 %v194, 0.0
        %v355 = vmax.f32 %v195, 0.0
        %v356 = vmax.f32 %v196, 0.0
        %v357 = vmax.f32 %v197, 0.0
        %v358 = vmax.f32 %v198, 0.0
        %v359 = vmax.f32 %v199, 0.0
        %v360 = vmax.f32 %v200, 0.0
        %v361 = vmax.f32 %v201, 0.0
        %v362 = vmax.f32 %v202, 0.0
        %v363 = vmax.f32 %v203, 0.0
        %v364 = vmax.f32 %v204, 0.0
        %v365 = vmax.f32 %v205, 0.0
        %v366 = vmax.f32 %v206, 0.0
        %v367 = vmax.f32 %v207, 0.0
        %v368 = vmax.f32 %v208, 0.0
        %v369 = vmax.f32 %v209, 0.0
        %v370 = vmax.f32 %v210, 0.0
        %v371 = vmax.f32 %v211, 0.0
        %v372 = vmax.f32 %v212, 0.0
        %v373 = vmax.f32 %v213, 0.0
        %v374 = vmax.f32 %v214, 0.0
        %v375 = vmax.f32 %v215, 0.0
        %v376 = vmax.f32 %v216, 0.0
        %v377 = vmax.f32 %v217, 0.0
        %v378 = vmax.f32 %v218, 0.0
        %v379 = vmax.f32 %v219, 0.0
        %v380 = vmax.f32 %v220, 0.0
        %v381 = vmax.f32 %v221, 0.0
        %v382 = vmax.f32 %v222, 0.0
        %v383 = vmax.f32 %v223, 0.0
        %v384 = vmax.f32 %v224, 0.0
        %v385 = vmax.f32 %v225, 0.0
        %v386 = vmax.f32 %v226, 0.0
        %v387 = vmax.f32 %v227, 0.0
        %v388 = vmax.f32 %v228, 0.0
        %v389 = vmax.f32 %v229, 0.0
        %v390 = vmax.f32 %v230, 0.0
        %v391 = vmax.f32 %v231, 0.0
        %v392 = vmax.f32 %v232, 0.0
        %v393 = vmax.f32 %v233, 0.0
        %v394 = vmax.f32 %v234, 0.0
        %v395 = vmax.f32 %v235, 0.0
        %v396 = vmax.f32 %v236, 0.0
        %v397 = vmax.f32 %v237, 0.0
        %v398 = vmax.f32 %v238, 0.0
        %v399 = vmax.f32 %v239, 0.0
        %v400 = vmax.f32 %v240, 0.0
        %v401 = vmax.f32 %v241, 0.0
        %v402 = vmax.f32 %v242, 0.0
        %v403 = vmax.f32 %v243, 0.0
        %v404 = vmax.f32 %v244, 0.0
        %v405 = vmax.f32 %v245, 0.0
        %v406 = vmax.f32 %v246, 0.0
        %v407 = vmax.f32 %v247, 0.0
        %v408 = vmax.f32 %v248, 0.0
        %v409 = vmax.f32 %v249, 0.0
        %v410 = vmax.f32 %v250, 0.0
        %v411 = vmax.f32 %v251, 0.0
        %v412 = vmax.f32 %v252, 0.0
        %v413 = vmax.f32 %v253, 0.0
        %v414 = vmax.f32 %v254, 0.0
        %v415 = vmax.f32 %v255, 0.0
        %v416 = vmax.f32 %v256, 0.0
        %v417 = vmax.f32 %v257, 0.0
        %v418 = vmax.f32 %v258, 0.0
        %v419 = vmax.f32 %v259, 0.0
        %v420 = vmax.f32 %v260, 0.0
        %v421 = vmax.f32 %v261, 0.0
        %v422 = vmax.f32 %v262, 0.0
        %v423 = vmax.f32 %v263, 0.0
        %v424 = vmax.f32 %v264, 0.0
        %v425 = vmax.f32 %v265, 0.0
        %v426 = vmax.f32 %v266, 0.0
        %v427 = vmax.f32 %v267, 0.0
        %v428 = vmax.f32 %v268, 0.0
        %v429 = vmax.f32 %v269, 0.0
        %v430 = vmax.f32 %v270, 0.0
        %v431 = vmax.f32 %v271, 0.0
        %v432 = vmax.f32 %v272, 0.0
        %v433 = vmax.f32 %v273, 0.0
        %v434 = vmax.f32 %v274, 0.0
        %v435 = vmax.f32 %v275, 0.0
        %v436 = vmax.f32 %v276, 0.0
        %v437 = vmax.f32 %v277, 0.0
        %v438 = vmax.f32 %v278, 0.0
        %v439 = vmax.f32 %v279, 0.0
        %v440 = vmax.f32 %v280, 0.0
        %v441 = vmax.f32 %v281, 0.0
        %v442 = vmax.f32 %v282, 0.0
        %v443 = vmax.f32 %v283, 0.0
        %v444 = vmax.f32 %v284, 0.0
        %v445 = vmax.f32 %v285, 0.0
        %v446 = vmax.f32 %v286, 0.0
        %v447 = vmax.f32 %v287, 0.0
        %v448 = vmax.f32 %v288, 0.0
        %v449 = vmax.f32 %v289, 0.0
        %v450 = vmax.f32 %v290, 0.0
        %v451 = vmax.f32 %v291, 0.0
        %v452 = vmax.f32 %v292, 0.0
        %v453 = vmax.f32 %v293, 0.0
        %v454 = vmax.f32 %v294, 0.0
        %v455 = vmax.f32 %v295, 0.0
        %v456 = vmax.f32 %v296, 0.0
        %v457 = vmax.f32 %v297, 0.0
        %v458 = vand.u32 2147483647, %v138
        %v459 = vand.u32 2147483647, %v139
        %v460 = vand.u32 2147483647, %v140
        %v461 = vand.u32 2147483647, %v141
        %v462 = vand.u32 2147483647, %v142
        %v463 = vand.u32 2147483647, %v143
        %v464 = vand.u32 2147483647, %v144
        %v465 = vand.u32 2147483647, %v145
        %v466 = vand.u32 2147483647, %v146
        %v467 = vand.u32 2147483647, %v147
        %v468 = vand.u32 2147483647, %v148
        %v469 = vand.u32 2147483647, %v149
        %v470 = vand.u32 2147483647, %v150
        %v471 = vand.u32 2147483647, %v151
        %v472 = vand.u32 2147483647, %v152
        %v473 = vand.u32 2147483647, %v153
        %v474 = vand.u32 2147483647, %v154
        %v475 = vand.u32 2147483647, %v155
        %v476 = vand.u32 2147483647, %v156
        %v477 = vand.u32 2147483647, %v157
        %v478 = vand.u32 2147483647, %v158
        %v479 = vand.u32 2147483647, %v159
        %v480 = vand.u32 2147483647, %v160
        %v481 = vand.u32 2147483647, %v161
        %v482 = vand.u32 2147483647, %v162
        %v483 = vand.u32 2147483647, %v163
        %v484 = vand.u32 2147483647, %v164
        %v485 = vand.u32 2147483647, %v165
        %v486 = vand.u32 2147483647, %v166
        %v487 = vand.u32 2147483647, %v167
        %v488 = vand.u32 2147483647, %v168
        %v489 = vand.u32 2147483647, %v169
        %v490 = vand.u32 2147483647, %v170
        %v491 = vand.u32 2147483647, %v171
        %v492 = vand.u32 2147483647, %v172
        %v493 = vand.u32 2147483647, %v173
        %v494 = vand.u32 2147483647, %v174
        %v495 = vand.u32 2147483647, %v175
        %v496 = vand.u32 2147483647, %v176
        %v497 = vand.u32 2147483647, %v177
        %v498 = vand.u32 2147483647, %v178
        %v499 = vand.u32 2147483647, %v179
        %v500 = vand.u32 2147483647, %v180
        %v501 = vand.u32 2147483647, %v181
        %v502 = vand.u32 2147483647, %v182
        %v503 = vand.u32 2147483647, %v183
        %v504 = vand.u32 2147483647, %v184
        %v505 = vand.u32 2147483647, %v185
        %v506 = vand.u32 2147483647, %v186
        %v507 = vand.u32 2147483647, %v187
        %v508 = vand.u32 2147483647, %v188
        %v509 = vand.u32 2147483647, %v189
        %v510 = vand.u32 2147483647, %v190
        %v511 = vand.u32 2147483647, %v191
        %v512 = vand.u32 2147483647, %v192
        %v513 = vand.u32 2147483647, %v193
        %v514 = vand.u32 2147483647, %v194
        %v515 = vand.u32 2147483647, %v195
        %v516 = vand.u32 2147483647, %v196
        %v517 = vand.u32 2147483647, %v197
        %v518 = vand.u32 2147483647, %v198
        %v519 = vand.u32 2147483647, %v199
        %v520 = vand.u32 2147483647, %v200
        %v521 = vand.u32 2147483647, %v201
        %v522 = vand.u32 2147483647, %v202
        %v523 = vand.u32 2147483647, %v203
        %v524 = vand.u32 2147483647, %v204
        %v525 = vand.u32 2147483647, %v205
        %v526 = vand.u32 2147483647, %v206
        %v527 = vand.u32 2147483647, %v207
        %v528 = vand.u32 2147483647, %v208
        %v529 = vand.u32 2147483647, %v209
        %v530 = vand.u32 2147483647, %v210
        %v531 = vand.u32 2147483647, %v211
        %v532 = vand.u32 2147483647, %v212
        %v533 = vand.u32 2147483647, %v213
        %v534 = vand.u32 2147483647, %v214
        %v535 = vand.u32 2147483647, %v215
        %v536 = vand.u32 2147483647, %v216
        %v537 = vand.u32 2147483647, %v217
        %v538 = vand.u32 2147483647, %v218
        %v539 = vand.u32 2147483647, %v219
        %v540 = vand.u32 2147483647, %v220
        %v541 = vand.u32 2147483647, %v221
        %v542 = vand.u32 2147483647, %v222
        %v543 = vand.u32 2147483647, %v223
        %v544 = vand.u32 2147483647, %v224
        %v545 = vand.u32 2147483647, %v225
        %v546 = vand.u32 2147483647, %v226
        %v547 = vand.u32 2147483647, %v227
        %v548 = vand.u32 2147483647, %v228
        %v549 = vand.u32 2147483647, %v229
        %v550 = vand.u32 2147483647, %v230
        %v551 = vand.u32 2147483647, %v231
        %v552 = vand.u32 2147483647, %v232
        %v553 = vand.u32 2147483647, %v233
        %v554 = vand.u32 2147483647, %v234
        %v555 = vand.u32 2147483647, %v235
        %v556 = vand.u32 2147483647, %v236
        %v557 = vand.u32 2147483647, %v237
        %v558 = vand.u32 2147483647, %v238
        %v559 = vand.u32 2147483647, %v239
        %v560 = vand.u32 2147483647, %v240
        %v561 = vand.u32 2147483647, %v241
        %v562 = vand.u32 2147483647, %v242
        %v563 = vand.u32 2147483647, %v243
        %v564 = vand.u32 2147483647, %v244
        %v565 = vand.u32 2147483647, %v245
        %v566 = vand.u32 2147483647, %v246
        %v567 = vand.u32 2147483647, %v247
        %v568 = vand.u32 2147483647, %v248
        %v569 = vand.u32 2147483647, %v249
        %v570 = vand.u32 2147483647, %v250
        %v571 = vand.u32 2147483647, %v251
        %v572 = vand.u32 2147483647, %v252
        %v573 = vand.u32 2147483647, %v253
        %v574 = vand.u32 2147483647, %v254
        %v575 = vand.u32 2147483647, %v255
        %v576 = vand.u32 2147483647, %v256
        %v577 = vand.u32 2147483647, %v257
        %v578 = vand.u32 2147483647, %v258
        %v579 = vand.u32 2147483647, %v259
        %v580 = vand.u32 2147483647, %v260
        %v581 = vand.u32 2147483647, %v261
        %v582 = vand.u32 2147483647, %v262
        %v583 = vand.u32 2147483647, %v263
        %v584 = vand.u32 2147483647, %v264
        %v585 = vand.u32 2147483647, %v265
        %v586 = vand.u32 2147483647, %v266
        %v587 = vand.u32 2147483647, %v267
        %v588 = vand.u32 2147483647, %v268
        %v589 = vand.u32 2147483647, %v269
        %v590 = vand.u32 2147483647, %v270
        %v591 = vand.u32 2147483647, %v271
        %v592 = vand.u32 2147483647, %v272
        %v593 = vand.u32 2147483647, %v273
        %v594 = vand.u32 2147483647, %v274
        %v595 = vand.u32 2147483647, %v275
        %v596 = vand.u32 2147483647, %v276
        %v597 = vand.u32 2147483647, %v277
        %v598 = vand.u32 2147483647, %v278
        %v599 = vand.u32 2147483647, %v279
        %v600 = vand.u32 2147483647, %v280
        %v601 = vand.u32 2147483647, %v281
        %v602 = vand.u32 2147483647, %v282
        %v603 = vand.u32 2147483647, %v283
        %v604 = vand.u32 2147483647, %v284
        %v605 = vand.u32 2147483647, %v285
        %v606 = vand.u32 2147483647, %v286
        %v607 = vand.u32 2147483647, %v287
        %v608 = vand.u32 2147483647, %v288
        %v609 = vand.u32 2147483647, %v289
        %v610 = vand.u32 2147483647, %v290
        %v611 = vand.u32 2147483647, %v291
        %v612 = vand.u32 2147483647, %v292
        %v613 = vand.u32 2147483647, %v293
        %v614 = vand.u32 2147483647, %v294
        %v615 = vand.u32 2147483647, %v295
        %v616 = vand.u32 2147483647, %v296
        %v617 = vand.u32 2147483647, %v297
        %v618 = vsub.f32 0.0, %v458
        %v619 = vsub.f32 0.0, %v459
        %v620 = vsub.f32 0.0, %v460
        %v621 = vsub.f32 0.0, %v461
        %v622 = vsub.f32 0.0, %v462
        %v623 = vsub.f32 0.0, %v463
        %v624 = vsub.f32 0.0, %v464
        %v625 = vsub.f32 0.0, %v465
        %v626 = vsub.f32 0.0, %v466
        %v627 = vsub.f32 0.0, %v467
        %v628 = vsub.f32 0.0, %v468
        %v629 = vsub.f32 0.0, %v469
        %v630 = vsub.f32 0.0, %v470
        %v631 = vsub.f32 0.0, %v471
        %v632 = vsub.f32 0.0, %v472
        %v633 = vsub.f32 0.0, %v473
        %v634 = vsub.f32 0.0, %v474
        %v635 = vsub.f32 0.0, %v475
        %v636 = vsub.f32 0.0, %v476
        %v637 = vsub.f32 0.0, %v477
        %v638 = vsub.f32 0.0, %v478
        %v639 = vsub.f32 0.0, %v479
        %v640 = vsub.f32 0.0, %v480
        %v641 = vsub.f32 0.0, %v481
        %v642 = vsub.f32 0.0, %v482
        %v643 = vsub.f32 0.0, %v483
        %v644 = vsub.f32 0.0, %v484
        %v645 = vsub.f32 0.0, %v485
        %v646 = vsub.f32 0.0, %v486
        %v647 = vsub.f32 0.0, %v487
        %v648 = vsub.f32 0.0, %v488
        %v649 = vsub.f32 0.0, %v489
        %v650 = vsub.f32 0.0, %v490
        %v651 = vsub.f32 0.0, %v491
        %v652 = vsub.f32 0.0, %v492
        %v653 = vsub.f32 0.0, %v493
        %v654 = vsub.f32 0.0, %v494
        %v655 = vsub.f32 0.0, %v495
        %v656 = vsub.f32 0.0, %v496
        %v657 = vsub.f32 0.0, %v497
        %v658 = vsub.f32 0.0, %v498
        %v659 = vsub.f32 0.0, %v499
        %v660 = vsub.f32 0.0, %v500
        %v661 = vsub.f32 0.0, %v501
        %v662 = vsub.f32 0.0, %v502
        %v663 = vsub.f32 0.0, %v503
        %v664 = vsub.f32 0.0, %v504
        %v665 = vsub.f32 0.0, %v505
        %v666 = vsub.f32 0.0, %v506
        %v667 = vsub.f32 0.0, %v507
        %v668 = vsub.f32 0.0, %v508
        %v669 = vsub.f32 0.0, %v509
        %v670 = vsub.f32 0.0, %v510
        %v671 = vsub.f32 0.0, %v511
        %v672 = vsub.f32 0.0, %v512
        %v673 = vsub.f32 0.0, %v513
        %v674 = vsub.f32 0.0, %v514
        %v675 = vsub.f32 0.0, %v515
        %v676 = vsub.f32 0.0, %v516
        %v677 = vsub.f32 0.0, %v517
        %v678 = vsub.f32 0.0, %v518
        %v679 = vsub.f32 0.0, %v519
        %v680 = vsub.f32 0.0, %v520
        %v681 = vsub.f32 0.0, %v521
        %v682 = vsub.f32 0.0, %v522
        %v683 = vsub.f32 0.0, %v523
        %v684 = vsub.f32 0.0, %v524
        %v685 = vsub.f32 0.0, %v525
        %v686 = vsub.f32 0.0, %v526
        %v687 = vsub.f32 0.0, %v527
        %v688 = vsub.f32 0.0, %v528
        %v689 = vsub.f32 0.0, %v529
        %v690 = vsub.f32 0.0, %v530
        %v691 = vsub.f32 0.0, %v531
        %v692 = vsub.f32 0.0, %v532
        %v693 = vsub.f32 0.0, %v533
        %v694 = vsub.f32 0.0, %v534
        %v695 = vsub.f32 0.0, %v535
        %v696 = vsub.f32 0.0, %v536
        %v697 = vsub.f32 0.0, %v537
        %v698 = vsub.f32 0.0, %v538
        %v699 = vsub.f32 0.0, %v539
        %v700 = vsub.f32 0.0, %v540
        %v701 = vsub.f32 0.0, %v541
        %v702 = vsub.f32 0.0, %v542
        %v703 = vsub.f32 0.0, %v543
        %v704 = vsub.f32 0.0, %v544
        %v705 = vsub.f32 0.0, %v545
        %v706 = vsub.f32 0.0, %v546
        %v707 = vsub.f32 0.0, %v547
        %v708 = vsub.f32 0.0, %v548
        %v709 = vsub.f32 0.0, %v549
        %v710 = vsub.f32 0.0, %v550
        %v711 = vsub.f32 0.0, %v551
        %v712 = vsub.f32 0.0, %v552
        %v713 = vsub.f32 0.0, %v553
        %v714 = vsub.f32 0.0, %v554
        %v715 = vsub.f32 0.0, %v555
        %v716 = vsub.f32 0.0, %v556
        %v717 = vsub.f32 0.0, %v557
        %v718 = vsub.f32 0.0, %v558
        %v719 = vsub.f32 0.0, %v559
        %v720 = vsub.f32 0.0, %v560
        %v721 = vsub.f32 0.0, %v561
        %v722 = vsub.f32 0.0, %v562
        %v723 = vsub.f32 0.0, %v563
        %v724 = vsub.f32 0.0, %v564
        %v725 = vsub.f32 0.0, %v565
        %v726 = vsub.f32 0.0, %v566
        %v727 = vsub.f32 0.0, %v567
        %v728 = vsub.f32 0.0, %v568
        %v729 = vsub.f32 0.0, %v569
        %v730 = vsub.f32 0.0, %v570
        %v731 = vsub.f32 0.0, %v571
        %v732 = vsub.f32 0.0, %v572
        %v733 = vsub.f32 0.0, %v573
        %v734 = vsub.f32 0.0, %v574
        %v735 = vsub.f32 0.0, %v575
        %v736 = vsub.f32 0.0, %v576
        %v737 = vsub.f32 0.0, %v577
        %v738 = vsub.f32 0.0, %v578
        %v739 = vsub.f32 0.0, %v579
        %v740 = vsub.f32 0.0, %v580
        %v741 = vsub.f32 0.0, %v581
        %v742 = vsub.f32 0.0, %v582
        %v743 = vsub.f32 0.0, %v583
        %v744 = vsub.f32 0.0, %v584
        %v745 = vsub.f32 0.0, %v585
        %v746 = vsub.f32 0.0, %v586
        %v747 = vsub.f32 0.0, %v587
        %v748 = vsub.f32 0.0, %v588
        %v749 = vsub.f32 0.0, %v589
        %v750 = vsub.f32 0.0, %v590
        %v751 = vsub.f32 0.0, %v591
        %v752 = vsub.f32 0.0, %v592
        %v753 = vsub.f32 0.0, %v593
        %v754 = vsub.f32 0.0, %v594
        %v755 = vsub.f32 0.0, %v595
        %v756 = vsub.f32 0.0, %v596
        %v757 = vsub.f32 0.0, %v597
        %v758 = vsub.f32 0.0, %v598
        %v759 = vsub.f32 0.0, %v599
        %v760 = vsub.f32 0.0, %v600
        %v761 = vsub.f32 0.0, %v601
        %v762 = vsub.f32 0.0, %v602
        %v763 = vsub.f32 0.0, %v603
        %v764 = vsub.f32 0.0, %v604
        %v765 = vsub.f32 0.0, %v605
        %v766 = vsub.f32 0.0, %v606
        %v767 = vsub.f32 0.0, %v607
        %v768 = vsub.f32 0.0, %v608
        %v769 = vsub.f32 0.0, %v609
        %v770 = vsub.f32 0.0, %v610
        %v771 = vsub.f32 0.0, %v611
        %v772 = vsub.f32 0.0, %v612
        %v773 = vsub.f32 0.0, %v613
        %v774 = vsub.f32 0.0, %v614
        %v775 = vsub.f32 0.0, %v615
        %v776 = vsub.f32 0.0, %v616
        %v777 = vsub.f32 0.0, %v617
        %v778 = vmul.f32 %v618, 1.442695
        %v779 = vpow.pop %v778
        %v780 = vmul.f32 %v619, 1.442695
        %v781 = vpow.pop %v780
        %v782 = vmul.f32 %v620, 1.442695
        %v783 = vpow.pop %v782
        %v784 = vmul.f32 %v621, 1.442695
        %v785 = vpow.pop %v784
        %v786 = vmul.f32 %v622, 1.442695
        %v787 = vpow.pop %v786
        %v788 = vmul.f32 %v623, 1.442695
        %v789 = vpow.pop %v788
        %v790 = vmul.f32 %v624, 1.442695
        %v791 = vpow.pop %v790
        %v792 = vmul.f32 %v625, 1.442695
        %v793 = vpow.pop %v792
        %v794 = vmul.f32 %v626, 1.442695
        %v795 = vpow.pop %v794
        %v796 = vmul.f32 %v627, 1.442695
        %v797 = vpow.pop %v796
        %v798 = vmul.f32 %v628, 1.442695
        %v799 = vpow.pop %v798
        %v800 = vmul.f32 %v629, 1.442695
        %v801 = vpow.pop %v800
        %v802 = vmul.f32 %v630, 1.442695
        %v803 = vpow.pop %v802
        %v804 = vmul.f32 %v631, 1.442695
        %v805 = vpow.pop %v804
        %v806 = vmul.f32 %v632, 1.442695
        %v807 = vpow.pop %v806
        %v808 = vmul.f32 %v633, 1.442695
        %v809 = vpow.pop %v808
        %v810 = vmul.f32 %v634, 1.442695
        %v811 = vpow.pop %v810
        %v812 = vmul.f32 %v635, 1.442695
        %v813 = vpow.pop %v812
        %v814 = vmul.f32 %v636, 1.442695
        %v815 = vpow.pop %v814
        %v816 = vmul.f32 %v637, 1.442695
        %v817 = vpow.pop %v816
        %v818 = vmul.f32 %v638, 1.442695
        %v819 = vpow.pop %v818
        %v820 = vmul.f32 %v639, 1.442695
        %v821 = vpow.pop %v820
        %v822 = vmul.f32 %v640, 1.442695
        %v823 = vpow.pop %v822
        %v824 = vmul.f32 %v641, 1.442695
        %v825 = vpow.pop %v824
        %v826 = vmul.f32 %v642, 1.442695
        %v827 = vpow.pop %v826
        %v828 = vmul.f32 %v643, 1.442695
        %v829 = vpow.pop %v828
        %v830 = vmul.f32 %v644, 1.442695
        %v831 = vpow.pop %v830
        %v832 = vmul.f32 %v645, 1.442695
        %v833 = vpow.pop %v832
        %v834 = vmul.f32 %v646, 1.442695
        %v835 = vpow.pop %v834
        %v836 = vmul.f32 %v647, 1.442695
        %v837 = vpow.pop %v836
        %v838 = vmul.f32 %v648, 1.442695
        %v839 = vpow.pop %v838
        %v840 = vmul.f32 %v649, 1.442695
        %v841 = vpow.pop %v840
        %v842 = vmul.f32 %v650, 1.442695
        %v843 = vpow.pop %v842
        %v844 = vmul.f32 %v651, 1.442695
        %v845 = vpow.pop %v844
        %v846 = vmul.f32 %v652, 1.442695
        %v847 = vpow.pop %v846
        %v848 = vmul.f32 %v653, 1.442695
        %v849 = vpow.pop %v848
        %v850 = vmul.f32 %v654, 1.442695
        %v851 = vpow.pop %v850
        %v852 = vmul.f32 %v655, 1.442695
        %v853 = vpow.pop %v852
        %v854 = vmul.f32 %v656, 1.442695
        %v855 = vpow.pop %v854
        %v856 = vmul.f32 %v657, 1.442695
        %v857 = vpow.pop %v856
        %v858 = vmul.f32 %v658, 1.442695
        %v859 = vpow.pop %v858
        %v860 = vmul.f32 %v659, 1.442695
        %v861 = vpow.pop %v860
        %v862 = vmul.f32 %v660, 1.442695
        %v863 = vpow.pop %v862
        %v864 = vmul.f32 %v661, 1.442695
        %v865 = vpow.pop %v864
        %v866 = vmul.f32 %v662, 1.442695
        %v867 = vpow.pop %v866
        %v868 = vmul.f32 %v663, 1.442695
        %v869 = vpow.pop %v868
        %v870 = vmul.f32 %v664, 1.442695
        %v871 = vpow.pop %v870
        %v872 = vmul.f32 %v665, 1.442695
        %v873 = vpow.pop %v872
        %v874 = vmul.f32 %v666, 1.442695
        %v875 = vpow.pop %v874
        %v876 = vmul.f32 %v667, 1.442695
        %v877 = vpow.pop %v876
        %v878 = vmul.f32 %v668, 1.442695
        %v879 = vpow.pop %v878
        %v880 = vmul.f32 %v669, 1.442695
        %v881 = vpow.pop %v880
        %v882 = vmul.f32 %v670, 1.442695
        %v883 = vpow.pop %v882
        %v884 = vmul.f32 %v671, 1.442695
        %v885 = vpow.pop %v884
        %v886 = vmul.f32 %v672, 1.442695
        %v887 = vpow.pop %v886
        %v888 = vmul.f32 %v673, 1.442695
        %v889 = vpow.pop %v888
        %v890 = vmul.f32 %v674, 1.442695
        %v891 = vpow.pop %v890
        %v892 = vmul.f32 %v675, 1.442695
        %v893 = vpow.pop %v892
        %v894 = vmul.f32 %v676, 1.442695
        %v895 = vpow.pop %v894
        %v896 = vmul.f32 %v677, 1.442695
        %v897 = vpow.pop %v896
        %v898 = vmul.f32 %v678, 1.442695
        %v899 = vpow.pop %v898
        %v900 = vmul.f32 %v679, 1.442695
        %v901 = vpow.pop %v900
        %v902 = vmul.f32 %v680, 1.442695
        %v903 = vpow.pop %v902
        %v904 = vmul.f32 %v681, 1.442695
        %v905 = vpow.pop %v904
        %v906 = vmul.f32 %v682, 1.442695
        %v907 = vpow.pop %v906
        %v908 = vmul.f32 %v683, 1.442695
        %v909 = vpow.pop %v908
        %v910 = vmul.f32 %v684, 1.442695
        %v911 = vpow.pop %v910
        %v912 = vmul.f32 %v685, 1.442695
        %v913 = vpow.pop %v912
        %v914 = vmul.f32 %v686, 1.442695
        %v915 = vpow.pop %v914
        %v916 = vmul.f32 %v687, 1.442695
        %v917 = vpow.pop %v916
        %v918 = vmul.f32 %v688, 1.442695
        %v919 = vpow.pop %v918
        %v920 = vmul.f32 %v689, 1.442695
        %v921 = vpow.pop %v920
        %v922 = vmul.f32 %v690, 1.442695
        %v923 = vpow.pop %v922
        %v924 = vmul.f32 %v691, 1.442695
        %v925 = vpow.pop %v924
        %v926 = vmul.f32 %v692, 1.442695
        %v927 = vpow.pop %v926
        %v928 = vmul.f32 %v693, 1.442695
        %v929 = vpow.pop %v928
        %v930 = vmul.f32 %v694, 1.442695
        %v931 = vpow.pop %v930
        %v932 = vmul.f32 %v695, 1.442695
        %v933 = vpow.pop %v932
        %v934 = vmul.f32 %v696, 1.442695
        %v935 = vpow.pop %v934
        %v936 = vmul.f32 %v697, 1.442695
        %v937 = vpow.pop %v936
        %v938 = vmul.f32 %v698, 1.442695
        %v939 = vpow.pop %v938
        %v940 = vmul.f32 %v699, 1.442695
        %v941 = vpow.pop %v940
        %v942 = vmul.f32 %v700, 1.442695
        %v943 = vpow.pop %v942
        %v944 = vmul.f32 %v701, 1.442695
        %v945 = vpow.pop %v944
        %v946 = vmul.f32 %v702, 1.442695
        %v947 = vpow.pop %v946
        %v948 = vmul.f32 %v703, 1.442695
        %v949 = vpow.pop %v948
        %v950 = vmul.f32 %v704, 1.442695
        %v951 = vpow.pop %v950
        %v952 = vmul.f32 %v705, 1.442695
        %v953 = vpow.pop %v952
        %v954 = vmul.f32 %v706, 1.442695
        %v955 = vpow.pop %v954
        %v956 = vmul.f32 %v707, 1.442695
        %v957 = vpow.pop %v956
        %v958 = vmul.f32 %v708, 1.442695
        %v959 = vpow.pop %v958
        %v960 = vmul.f32 %v709, 1.442695
        %v961 = vpow.pop %v960
        %v962 = vmul.f32 %v710, 1.442695
        %v963 = vpow.pop %v962
        %v964 = vmul.f32 %v711, 1.442695
        %v965 = vpow.pop %v964
        %v966 = vmul.f32 %v712, 1.442695
        %v967 = vpow.pop %v966
        %v968 = vmul.f32 %v713, 1.442695
        %v969 = vpow.pop %v968
        %v970 = vmul.f32 %v714, 1.442695
        %v971 = vpow.pop %v970
        %v972 = vmul.f32 %v715, 1.442695
        %v973 = vpow.pop %v972
        %v974 = vmul.f32 %v716, 1.442695
        %v975 = vpow.pop %v974
        %v976 = vmul.f32 %v717, 1.442695
        %v977 = vpow.pop %v976
        %v978 = vmul.f32 %v718, 1.442695
        %v979 = vpow.pop %v978
        %v980 = vmul.f32 %v719, 1.442695
        %v981 = vpow.pop %v980
        %v982 = vmul.f32 %v720, 1.442695
        %v983 = vpow.pop %v982
        %v984 = vmul.f32 %v721, 1.442695
        %v985 = vpow.pop %v984
        %v986 = vmul.f32 %v722, 1.442695
        %v987 = vpow.pop %v986
        %v988 = vmul.f32 %v723, 1.442695
        %v989 = vpow.pop %v988
        %v990 = vmul.f32 %v724, 1.442695
        %v991 = vpow.pop %v990
        %v992 = vmul.f32 %v725, 1.442695
        %v993 = vpow.pop %v992
        %v994 = vmul.f32 %v726, 1.442695
        %v995 = vpow.pop %v994
        %v996 = vmul.f32 %v727, 1.442695
        %v997 = vpow.pop %v996
        %v998 = vmul.f32 %v728, 1.442695
        %v999 = vpow.pop %v998
        %v1000 = vmul.f32 %v729, 1.442695
        %v1001 = vpow.pop %v1000
        %v1002 = vmul.f32 %v730, 1.442695
        %v1003 = vpow.pop %v1002
        %v1004 = vmul.f32 %v731, 1.442695
        %v1005 = vpow.pop %v1004
        %v1006 = vmul.f32 %v732, 1.442695
        %v1007 = vpow.pop %v1006
        %v1008 = vmul.f32 %v733, 1.442695
        %v1009 = vpow.pop %v1008
        %v1010 = vmul.f32 %v734, 1.442695
        %v1011 = vpow.pop %v1010
        %v1012 = vmul.f32 %v735, 1.442695
        %v1013 = vpow.pop %v1012
        %v1014 = vmul.f32 %v736, 1.442695
        %v1015 = vpow.pop %v1014
        %v1016 = vmul.f32 %v737, 1.442695
        %v1017 = vpow.pop %v1016
        %v1018 = vmul.f32 %v738, 1.442695
        %v1019 = vpow.pop %v1018
        %v1020 = vmul.f32 %v739, 1.442695
        %v1021 = vpow.pop %v1020
        %v1022 = vmul.f32 %v740, 1.442695
        %v1023 = vpow.pop %v1022
        %v1024 = vmul.f32 %v741, 1.442695
        %v1025 = vpow.pop %v1024
        %v1026 = vmul.f32 %v742, 1.442695
        %v1027 = vpow.pop %v1026
        %v1028 = vmul.f32 %v743, 1.442695
        %v1029 = vpow.pop %v1028
        %v1030 = vmul.f32 %v744, 1.442695
        %v1031 = vpow.pop %v1030
        %v1032 = vmul.f32 %v745, 1.442695
        %v1033 = vpow.pop %v1032
        %v1034 = vmul.f32 %v746, 1.442695
        %v1035 = vpow.pop %v1034
        %v1036 = vmul.f32 %v747, 1.442695
        %v1037 = vpow.pop %v1036
        %v1038 = vmul.f32 %v748, 1.442695
        %v1039 = vpow.pop %v1038
        %v1040 = vmul.f32 %v749, 1.442695
        %v1041 = vpow.pop %v1040
        %v1042 = vmul.f32 %v750, 1.442695
        %v1043 = vpow.pop %v1042
        %v1044 = vmul.f32 %v751, 1.442695
        %v1045 = vpow.pop %v1044
        %v1046 = vmul.f32 %v752, 1.442695
        %v1047 = vpow.pop %v1046
        %v1048 = vmul.f32 %v753, 1.442695
        %v1049 = vpow.pop %v1048
        %v1050 = vmul.f32 %v754, 1.442695
        %v1051 = vpow.pop %v1050
        %v1052 = vmul.f32 %v755, 1.442695
        %v1053 = vpow.pop %v1052
        %v1054 = vmul.f32 %v756, 1.442695
        %v1055 = vpow.pop %v1054
        %v1056 = vmul.f32 %v757, 1.442695
        %v1057 = vpow.pop %v1056
        %v1058 = vmul.f32 %v758, 1.442695
        %v1059 = vpow.pop %v1058
        %v1060 = vmul.f32 %v759, 1.442695
        %v1061 = vpow.pop %v1060
        %v1062 = vmul.f32 %v760, 1.442695
        %v1063 = vpow.pop %v1062
        %v1064 = vmul.f32 %v761, 1.442695
        %v1065 = vpow.pop %v1064
        %v1066 = vmul.f32 %v762, 1.442695
        %v1067 = vpow.pop %v1066
        %v1068 = vmul.f32 %v763, 1.442695
        %v1069 = vpow.pop %v1068
        %v1070 = vmul.f32 %v764, 1.442695
        %v1071 = vpow.pop %v1070
        %v1072 = vmul.f32 %v765, 1.442695
        %v1073 = vpow.pop %v1072
        %v1074 = vmul.f32 %v766, 1.442695
        %v1075 = vpow.pop %v1074
        %v1076 = vmul.f32 %v767, 1.442695
        %v1077 = vpow.pop %v1076
        %v1078 = vmul.f32 %v768, 1.442695
        %v1079 = vpow.pop %v1078
        %v1080 = vmul.f32 %v769, 1.442695
        %v1081 = vpow.pop %v1080
        %v1082 = vmul.f32 %v770, 1.442695
        %v1083 = vpow.pop %v1082
        %v1084 = vmul.f32 %v771, 1.442695
        %v1085 = vpow.pop %v1084
        %v1086 = vmul.f32 %v772, 1.442695
        %v1087 = vpow.pop %v1086
        %v1088 = vmul.f32 %v773, 1.442695
        %v1089 = vpow.pop %v1088
        %v1090 = vmul.f32 %v774, 1.442695
        %v1091 = vpow.pop %v1090
        %v1092 = vmul.f32 %v775, 1.442695
        %v1093 = vpow.pop %v1092
        %v1094 = vmul.f32 %v776, 1.442695
        %v1095 = vpow.pop %v1094
        %v1096 = vmul.f32 %v777, 1.442695
        %v1097 = vpow.pop %v1096
        %v1098 = vadd.f32 %v779, 1.0
        %v1099 = vlog2.pop %v1098
        %v1100 = vmul.f32 %v1099, 0.6931472
        %v1101 = vmul.f32 -0.5, %v779
        %v1102 = vadd.f32 %v1101, 1.0
        %v1103 = vmul.f32 %v1102, %v779
        %v1104 = vand.u32 2147483647, %v779
        %vm1105 = vcmp.lt.f32.partialorder %v1104, 0.0004427343
        %v1106 = vsel %vm1105, %v1103, %v1100
        %v1107 = vadd.f32 %v781, 1.0
        %v1108 = vlog2.pop %v1107
        %v1109 = vmul.f32 %v1108, 0.6931472
        %v1110 = vmul.f32 -0.5, %v781
        %v1111 = vadd.f32 %v1110, 1.0
        %v1112 = vmul.f32 %v1111, %v781
        %v1113 = vand.u32 2147483647, %v781
        %vm1114 = vcmp.lt.f32.partialorder %v1113, 0.0004427343
        %v1115 = vsel %vm1114, %v1112, %v1109
        %v1116 = vadd.f32 %v783, 1.0
        %v1117 = vlog2.pop %v1116
        %v1118 = vmul.f32 %v1117, 0.6931472
        %v1119 = vmul.f32 -0.5, %v783
        %v1120 = vadd.f32 %v1119, 1.0
        %v1121 = vmul.f32 %v1120, %v783
        %v1122 = vand.u32 2147483647, %v783
        %vm1123 = vcmp.lt.f32.partialorder %v1122, 0.0004427343
        %v1124 = vsel %vm1123, %v1121, %v1118
        %v1125 = vadd.f32 %v785, 1.0
        %v1126 = vlog2.pop %v1125
        %v1127 = vmul.f32 %v1126, 0.6931472
        %v1128 = vmul.f32 -0.5, %v785
        %v1129 = vadd.f32 %v1128, 1.0
        %v1130 = vmul.f32 %v1129, %v785
        %v1131 = vand.u32 2147483647, %v785
        %vm1132 = vcmp.lt.f32.partialorder %v1131, 0.0004427343
        %v1133 = vsel %vm1132, %v1130, %v1127
        %v1134 = vadd.f32 %v787, 1.0
        %v1135 = vlog2.pop %v1134
        %v1136 = vmul.f32 %v1135, 0.6931472
        %v1137 = vmul.f32 -0.5, %v787
        %v1138 = vadd.f32 %v1137, 1.0
        %v1139 = vmul.f32 %v1138, %v787
        %v1140 = vand.u32 2147483647, %v787
        %vm1141 = vcmp.lt.f32.partialorder %v1140, 0.0004427343
        %v1142 = vsel %vm1141, %v1139, %v1136
        %v1143 = vadd.f32 %v789, 1.0
        %v1144 = vlog2.pop %v1143
        %v1145 = vmul.f32 %v1144, 0.6931472
        %v1146 = vmul.f32 -0.5, %v789
        %v1147 = vadd.f32 %v1146, 1.0
        %v1148 = vmul.f32 %v1147, %v789
        %v1149 = vand.u32 2147483647, %v789
        %vm1150 = vcmp.lt.f32.partialorder %v1149, 0.0004427343
        %v1151 = vsel %vm1150, %v1148, %v1145
        %v1152 = vadd.f32 %v791, 1.0
        %v1153 = vlog2.pop %v1152
        %v1154 = vmul.f32 %v1153, 0.6931472
        %v1155 = vmul.f32 -0.5, %v791
        %v1156 = vadd.f32 %v1155, 1.0
        %v1157 = vmul.f32 %v1156, %v791
        %v1158 = vand.u32 2147483647, %v791
        %vm1159 = vcmp.lt.f32.partialorder %v1158, 0.0004427343
        %v1160 = vsel %vm1159, %v1157, %v1154
        %v1161 = vadd.f32 %v793, 1.0
        %v1162 = vlog2.pop %v1161
        %v1163 = vmul.f32 %v1162, 0.6931472
        %v1164 = vmul.f32 -0.5, %v793
        %v1165 = vadd.f32 %v1164, 1.0
        %v1166 = vmul.f32 %v1165, %v793
        %v1167 = vand.u32 2147483647, %v793
        %vm1168 = vcmp.lt.f32.partialorder %v1167, 0.0004427343
        %v1169 = vsel %vm1168, %v1166, %v1163
        %v1170 = vadd.f32 %v795, 1.0
        %v1171 = vlog2.pop %v1170
        %v1172 = vmul.f32 %v1171, 0.6931472
        %v1173 = vmul.f32 -0.5, %v795
        %v1174 = vadd.f32 %v1173, 1.0
        %v1175 = vmul.f32 %v1174, %v795
        %v1176 = vand.u32 2147483647, %v795
        %vm1177 = vcmp.lt.f32.partialorder %v1176, 0.0004427343
        %v1178 = vsel %vm1177, %v1175, %v1172
        %v1179 = vadd.f32 %v797, 1.0
        %v1180 = vlog2.pop %v1179
        %v1181 = vmul.f32 %v1180, 0.6931472
        %v1182 = vmul.f32 -0.5, %v797
        %v1183 = vadd.f32 %v1182, 1.0
        %v1184 = vmul.f32 %v1183, %v797
        %v1185 = vand.u32 2147483647, %v797
        %vm1186 = vcmp.lt.f32.partialorder %v1185, 0.0004427343
        %v1187 = vsel %vm1186, %v1184, %v1181
        %v1188 = vadd.f32 %v799, 1.0
        %v1189 = vlog2.pop %v1188
        %v1190 = vmul.f32 %v1189, 0.6931472
        %v1191 = vmul.f32 -0.5, %v799
        %v1192 = vadd.f32 %v1191, 1.0
        %v1193 = vmul.f32 %v1192, %v799
        %v1194 = vand.u32 2147483647, %v799
        %vm1195 = vcmp.lt.f32.partialorder %v1194, 0.0004427343
        %v1196 = vsel %vm1195, %v1193, %v1190
        %v1197 = vadd.f32 %v801, 1.0
        %v1198 = vlog2.pop %v1197
        %v1199 = vmul.f32 %v1198, 0.6931472
        %v1200 = vmul.f32 -0.5, %v801
        %v1201 = vadd.f32 %v1200, 1.0
        %v1202 = vmul.f32 %v1201, %v801
        %v1203 = vand.u32 2147483647, %v801
        %vm1204 = vcmp.lt.f32.partialorder %v1203, 0.0004427343
        %v1205 = vsel %vm1204, %v1202, %v1199
        %v1206 = vadd.f32 %v803, 1.0
        %v1207 = vlog2.pop %v1206
        %v1208 = vmul.f32 %v1207, 0.6931472
        %v1209 = vmul.f32 -0.5, %v803
        %v1210 = vadd.f32 %v1209, 1.0
        %v1211 = vmul.f32 %v1210, %v803
        %v1212 = vand.u32 2147483647, %v803
        %vm1213 = vcmp.lt.f32.partialorder %v1212, 0.0004427343
        %v1214 = vsel %vm1213, %v1211, %v1208
        %v1215 = vadd.f32 %v805, 1.0
        %v1216 = vlog2.pop %v1215
        %v1217 = vmul.f32 %v1216, 0.6931472
        %v1218 = vmul.f32 -0.5, %v805
        %v1219 = vadd.f32 %v1218, 1.0
        %v1220 = vmul.f32 %v1219, %v805
        %v1221 = vand.u32 2147483647, %v805
        %vm1222 = vcmp.lt.f32.partialorder %v1221, 0.0004427343
        %v1223 = vsel %vm1222, %v1220, %v1217
        %v1224 = vadd.f32 %v807, 1.0
        %v1225 = vlog2.pop %v1224
        %v1226 = vmul.f32 %v1225, 0.6931472
        %v1227 = vmul.f32 -0.5, %v807
        %v1228 = vadd.f32 %v1227, 1.0
        %v1229 = vmul.f32 %v1228, %v807
        %v1230 = vand.u32 2147483647, %v807
        %vm1231 = vcmp.lt.f32.partialorder %v1230, 0.0004427343
        %v1232 = vsel %vm1231, %v1229, %v1226
        %v1233 = vadd.f32 %v809, 1.0
        %v1234 = vlog2.pop %v1233
        %v1235 = vmul.f32 %v1234, 0.6931472
        %v1236 = vmul.f32 -0.5, %v809
        %v1237 = vadd.f32 %v1236, 1.0
        %v1238 = vmul.f32 %v1237, %v809
        %v1239 = vand.u32 2147483647, %v809
        %vm1240 = vcmp.lt.f32.partialorder %v1239, 0.0004427343
        %v1241 = vsel %vm1240, %v1238, %v1235
        %v1242 = vadd.f32 %v811, 1.0
        %v1243 = vlog2.pop %v1242
        %v1244 = vmul.f32 %v1243, 0.6931472
        %v1245 = vmul.f32 -0.5, %v811
        %v1246 = vadd.f32 %v1245, 1.0
        %v1247 = vmul.f32 %v1246, %v811
        %v1248 = vand.u32 2147483647, %v811
        %vm1249 = vcmp.lt.f32.partialorder %v1248, 0.0004427343
        %v1250 = vsel %vm1249, %v1247, %v1244
        %v1251 = vadd.f32 %v813, 1.0
        %v1252 = vlog2.pop %v1251
        %v1253 = vmul.f32 %v1252, 0.6931472
        %v1254 = vmul.f32 -0.5, %v813
        %v1255 = vadd.f32 %v1254, 1.0
        %v1256 = vmul.f32 %v1255, %v813
        %v1257 = vand.u32 2147483647, %v813
        %vm1258 = vcmp.lt.f32.partialorder %v1257, 0.0004427343
        %v1259 = vsel %vm1258, %v1256, %v1253
        %v1260 = vadd.f32 %v815, 1.0
        %v1261 = vlog2.pop %v1260
        %v1262 = vmul.f32 %v1261, 0.6931472
        %v1263 = vmul.f32 -0.5, %v815
        %v1264 = vadd.f32 %v1263, 1.0
        %v1265 = vmul.f32 %v1264, %v815
        %v1266 = vand.u32 2147483647, %v815
        %vm1267 = vcmp.lt.f32.partialorder %v1266, 0.0004427343
        %v1268 = vsel %vm1267, %v1265, %v1262
        %v1269 = vadd.f32 %v817, 1.0
        %v1270 = vlog2.pop %v1269
        %v1271 = vmul.f32 %v1270, 0.6931472
        %v1272 = vmul.f32 -0.5, %v817
        %v1273 = vadd.f32 %v1272, 1.0
        %v1274 = vmul.f32 %v1273, %v817
        %v1275 = vand.u32 2147483647, %v817
        %vm1276 = vcmp.lt.f32.partialorder %v1275, 0.0004427343
        %v1277 = vsel %vm1276, %v1274, %v1271
        %v1278 = vadd.f32 %v819, 1.0
        %v1279 = vlog2.pop %v1278
        %v1280 = vmul.f32 %v1279, 0.6931472
        %v1281 = vmul.f32 -0.5, %v819
        %v1282 = vadd.f32 %v1281, 1.0
        %v1283 = vmul.f32 %v1282, %v819
        %v1284 = vand.u32 2147483647, %v819
        %vm1285 = vcmp.lt.f32.partialorder %v1284, 0.0004427343
        %v1286 = vsel %vm1285, %v1283, %v1280
        %v1287 = vadd.f32 %v821, 1.0
        %v1288 = vlog2.pop %v1287
        %v1289 = vmul.f32 %v1288, 0.6931472
        %v1290 = vmul.f32 -0.5, %v821
        %v1291 = vadd.f32 %v1290, 1.0
        %v1292 = vmul.f32 %v1291, %v821
        %v1293 = vand.u32 2147483647, %v821
        %vm1294 = vcmp.lt.f32.partialorder %v1293, 0.0004427343
        %v1295 = vsel %vm1294, %v1292, %v1289
        %v1296 = vadd.f32 %v823, 1.0
        %v1297 = vlog2.pop %v1296
        %v1298 = vmul.f32 %v1297, 0.6931472
        %v1299 = vmul.f32 -0.5, %v823
        %v1300 = vadd.f32 %v1299, 1.0
        %v1301 = vmul.f32 %v1300, %v823
        %v1302 = vand.u32 2147483647, %v823
        %vm1303 = vcmp.lt.f32.partialorder %v1302, 0.0004427343
        %v1304 = vsel %vm1303, %v1301, %v1298
        %v1305 = vadd.f32 %v825, 1.0
        %v1306 = vlog2.pop %v1305
        %v1307 = vmul.f32 %v1306, 0.6931472
        %v1308 = vmul.f32 -0.5, %v825
        %v1309 = vadd.f32 %v1308, 1.0
        %v1310 = vmul.f32 %v1309, %v825
        %v1311 = vand.u32 2147483647, %v825
        %vm1312 = vcmp.lt.f32.partialorder %v1311, 0.0004427343
        %v1313 = vsel %vm1312, %v1310, %v1307
        %v1314 = vadd.f32 %v827, 1.0
        %v1315 = vlog2.pop %v1314
        %v1316 = vmul.f32 %v1315, 0.6931472
        %v1317 = vmul.f32 -0.5, %v827
        %v1318 = vadd.f32 %v1317, 1.0
        %v1319 = vmul.f32 %v1318, %v827
        %v1320 = vand.u32 2147483647, %v827
        %vm1321 = vcmp.lt.f32.partialorder %v1320, 0.0004427343
        %v1322 = vsel %vm1321, %v1319, %v1316
        %v1323 = vadd.f32 %v829, 1.0
        %v1324 = vlog2.pop %v1323
        %v1325 = vmul.f32 %v1324, 0.6931472
        %v1326 = vmul.f32 -0.5, %v829
        %v1327 = vadd.f32 %v1326, 1.0
        %v1328 = vmul.f32 %v1327, %v829
        %v1329 = vand.u32 2147483647, %v829
        %vm1330 = vcmp.lt.f32.partialorder %v1329, 0.0004427343
        %v1331 = vsel %vm1330, %v1328, %v1325
        %v1332 = vadd.f32 %v831, 1.0
        %v1333 = vlog2.pop %v1332
        %v1334 = vmul.f32 %v1333, 0.6931472
        %v1335 = vmul.f32 -0.5, %v831
        %v1336 = vadd.f32 %v1335, 1.0
        %v1337 = vmul.f32 %v1336, %v831
        %v1338 = vand.u32 2147483647, %v831
        %vm1339 = vcmp.lt.f32.partialorder %v1338, 0.0004427343
        %v1340 = vsel %vm1339, %v1337, %v1334
        %v1341 = vadd.f32 %v833, 1.0
        %v1342 = vlog2.pop %v1341
        %v1343 = vmul.f32 %v1342, 0.6931472
        %v1344 = vmul.f32 -0.5, %v833
        %v1345 = vadd.f32 %v1344, 1.0
        %v1346 = vmul.f32 %v1345, %v833
        %v1347 = vand.u32 2147483647, %v833
        %vm1348 = vcmp.lt.f32.partialorder %v1347, 0.0004427343
        %v1349 = vsel %vm1348, %v1346, %v1343
        %v1350 = vadd.f32 %v835, 1.0
        %v1351 = vlog2.pop %v1350
        %v1352 = vmul.f32 %v1351, 0.6931472
        %v1353 = vmul.f32 -0.5, %v835
        %v1354 = vadd.f32 %v1353, 1.0
        %v1355 = vmul.f32 %v1354, %v835
        %v1356 = vand.u32 2147483647, %v835
        %vm1357 = vcmp.lt.f32.partialorder %v1356, 0.0004427343
        %v1358 = vsel %vm1357, %v1355, %v1352
        %v1359 = vadd.f32 %v837, 1.0
        %v1360 = vlog2.pop %v1359
        %v1361 = vmul.f32 %v1360, 0.6931472
        %v1362 = vmul.f32 -0.5, %v837
        %v1363 = vadd.f32 %v1362, 1.0
        %v1364 = vmul.f32 %v1363, %v837
        %v1365 = vand.u32 2147483647, %v837
        %vm1366 = vcmp.lt.f32.partialorder %v1365, 0.0004427343
        %v1367 = vsel %vm1366, %v1364, %v1361
        %v1368 = vadd.f32 %v839, 1.0
        %v1369 = vlog2.pop %v1368
        %v1370 = vmul.f32 %v1369, 0.6931472
        %v1371 = vmul.f32 -0.5, %v839
        %v1372 = vadd.f32 %v1371, 1.0
        %v1373 = vmul.f32 %v1372, %v839
        %v1374 = vand.u32 2147483647, %v839
        %vm1375 = vcmp.lt.f32.partialorder %v1374, 0.0004427343
        %v1376 = vsel %vm1375, %v1373, %v1370
        %v1377 = vadd.f32 %v841, 1.0
        %v1378 = vlog2.pop %v1377
        %v1379 = vmul.f32 %v1378, 0.6931472
        %v1380 = vmul.f32 -0.5, %v841
        %v1381 = vadd.f32 %v1380, 1.0
        %v1382 = vmul.f32 %v1381, %v841
        %v1383 = vand.u32 2147483647, %v841
        %vm1384 = vcmp.lt.f32.partialorder %v1383, 0.0004427343
        %v1385 = vsel %vm1384, %v1382, %v1379
        %v1386 = vadd.f32 %v843, 1.0
        %v1387 = vlog2.pop %v1386
        %v1388 = vmul.f32 %v1387, 0.6931472
        %v1389 = vmul.f32 -0.5, %v843
        %v1390 = vadd.f32 %v1389, 1.0
        %v1391 = vmul.f32 %v1390, %v843
        %v1392 = vand.u32 2147483647, %v843
        %vm1393 = vcmp.lt.f32.partialorder %v1392, 0.0004427343
        %v1394 = vsel %vm1393, %v1391, %v1388
        %v1395 = vadd.f32 %v845, 1.0
        %v1396 = vlog2.pop %v1395
        %v1397 = vmul.f32 %v1396, 0.6931472
        %v1398 = vmul.f32 -0.5, %v845
        %v1399 = vadd.f32 %v1398, 1.0
        %v1400 = vmul.f32 %v1399, %v845
        %v1401 = vand.u32 2147483647, %v845
        %vm1402 = vcmp.lt.f32.partialorder %v1401, 0.0004427343
        %v1403 = vsel %vm1402, %v1400, %v1397
        %v1404 = vadd.f32 %v847, 1.0
        %v1405 = vlog2.pop %v1404
        %v1406 = vmul.f32 %v1405, 0.6931472
        %v1407 = vmul.f32 -0.5, %v847
        %v1408 = vadd.f32 %v1407, 1.0
        %v1409 = vmul.f32 %v1408, %v847
        %v1410 = vand.u32 2147483647, %v847
        %vm1411 = vcmp.lt.f32.partialorder %v1410, 0.0004427343
        %v1412 = vsel %vm1411, %v1409, %v1406
        %v1413 = vadd.f32 %v849, 1.0
        %v1414 = vlog2.pop %v1413
        %v1415 = vmul.f32 %v1414, 0.6931472
        %v1416 = vmul.f32 -0.5, %v849
        %v1417 = vadd.f32 %v1416, 1.0
        %v1418 = vmul.f32 %v1417, %v849
        %v1419 = vand.u32 2147483647, %v849
        %vm1420 = vcmp.lt.f32.partialorder %v1419, 0.0004427343
        %v1421 = vsel %vm1420, %v1418, %v1415
        %v1422 = vadd.f32 %v851, 1.0
        %v1423 = vlog2.pop %v1422
        %v1424 = vmul.f32 %v1423, 0.6931472
        %v1425 = vmul.f32 -0.5, %v851
        %v1426 = vadd.f32 %v1425, 1.0
        %v1427 = vmul.f32 %v1426, %v851
        %v1428 = vand.u32 2147483647, %v851
        %vm1429 = vcmp.lt.f32.partialorder %v1428, 0.0004427343
        %v1430 = vsel %vm1429, %v1427, %v1424
        %v1431 = vadd.f32 %v853, 1.0
        %v1432 = vlog2.pop %v1431
        %v1433 = vmul.f32 %v1432, 0.6931472
        %v1434 = vmul.f32 -0.5, %v853
        %v1435 = vadd.f32 %v1434, 1.0
        %v1436 = vmul.f32 %v1435, %v853
        %v1437 = vand.u32 2147483647, %v853
        %vm1438 = vcmp.lt.f32.partialorder %v1437, 0.0004427343
        %v1439 = vsel %vm1438, %v1436, %v1433
        %v1440 = vadd.f32 %v855, 1.0
        %v1441 = vlog2.pop %v1440
        %v1442 = vmul.f32 %v1441, 0.6931472
        %v1443 = vmul.f32 -0.5, %v855
        %v1444 = vadd.f32 %v1443, 1.0
        %v1445 = vmul.f32 %v1444, %v855
        %v1446 = vand.u32 2147483647, %v855
        %vm1447 = vcmp.lt.f32.partialorder %v1446, 0.0004427343
        %v1448 = vsel %vm1447, %v1445, %v1442
        %v1449 = vadd.f32 %v857, 1.0
        %v1450 = vlog2.pop %v1449
        %v1451 = vmul.f32 %v1450, 0.6931472
        %v1452 = vmul.f32 -0.5, %v857
        %v1453 = vadd.f32 %v1452, 1.0
        %v1454 = vmul.f32 %v1453, %v857
        %v1455 = vand.u32 2147483647, %v857
        %vm1456 = vcmp.lt.f32.partialorder %v1455, 0.0004427343
        %v1457 = vsel %vm1456, %v1454, %v1451
        %v1458 = vadd.f32 %v859, 1.0
        %v1459 = vlog2.pop %v1458
        %v1460 = vmul.f32 %v1459, 0.6931472
        %v1461 = vmul.f32 -0.5, %v859
        %v1462 = vadd.f32 %v1461, 1.0
        %v1463 = vmul.f32 %v1462, %v859
        %v1464 = vand.u32 2147483647, %v859
        %vm1465 = vcmp.lt.f32.partialorder %v1464, 0.0004427343
        %v1466 = vsel %vm1465, %v1463, %v1460
        %v1467 = vadd.f32 %v861, 1.0
        %v1468 = vlog2.pop %v1467
        %v1469 = vmul.f32 %v1468, 0.6931472
        %v1470 = vmul.f32 -0.5, %v861
        %v1471 = vadd.f32 %v1470, 1.0
        %v1472 = vmul.f32 %v1471, %v861
        %v1473 = vand.u32 2147483647, %v861
        %vm1474 = vcmp.lt.f32.partialorder %v1473, 0.0004427343
        %v1475 = vsel %vm1474, %v1472, %v1469
        %v1476 = vadd.f32 %v863, 1.0
        %v1477 = vlog2.pop %v1476
        %v1478 = vmul.f32 %v1477, 0.6931472
        %v1479 = vmul.f32 -0.5, %v863
        %v1480 = vadd.f32 %v1479, 1.0
        %v1481 = vmul.f32 %v1480, %v863
        %v1482 = vand.u32 2147483647, %v863
        %vm1483 = vcmp.lt.f32.partialorder %v1482, 0.0004427343
        %v1484 = vsel %vm1483, %v1481, %v1478
        %v1485 = vadd.f32 %v865, 1.0
        %v1486 = vlog2.pop %v1485
        %v1487 = vmul.f32 %v1486, 0.6931472
        %v1488 = vmul.f32 -0.5, %v865
        %v1489 = vadd.f32 %v1488, 1.0
        %v1490 = vmul.f32 %v1489, %v865
        %v1491 = vand.u32 2147483647, %v865
        %vm1492 = vcmp.lt.f32.partialorder %v1491, 0.0004427343
        %v1493 = vsel %vm1492, %v1490, %v1487
        %v1494 = vadd.f32 %v867, 1.0
        %v1495 = vlog2.pop %v1494
        %v1496 = vmul.f32 %v1495, 0.6931472
        %v1497 = vmul.f32 -0.5, %v867
        %v1498 = vadd.f32 %v1497, 1.0
        %v1499 = vmul.f32 %v1498, %v867
        %v1500 = vand.u32 2147483647, %v867
        %vm1501 = vcmp.lt.f32.partialorder %v1500, 0.0004427343
        %v1502 = vsel %vm1501, %v1499, %v1496
        %v1503 = vadd.f32 %v869, 1.0
        %v1504 = vlog2.pop %v1503
        %v1505 = vmul.f32 %v1504, 0.6931472
        %v1506 = vmul.f32 -0.5, %v869
        %v1507 = vadd.f32 %v1506, 1.0
        %v1508 = vmul.f32 %v1507, %v869
        %v1509 = vand.u32 2147483647, %v869
        %vm1510 = vcmp.lt.f32.partialorder %v1509, 0.0004427343
        %v1511 = vsel %vm1510, %v1508, %v1505
        %v1512 = vadd.f32 %v871, 1.0
        %v1513 = vlog2.pop %v1512
        %v1514 = vmul.f32 %v1513, 0.6931472
        %v1515 = vmul.f32 -0.5, %v871
        %v1516 = vadd.f32 %v1515, 1.0
        %v1517 = vmul.f32 %v1516, %v871
        %v1518 = vand.u32 2147483647, %v871
        %vm1519 = vcmp.lt.f32.partialorder %v1518, 0.0004427343
        %v1520 = vsel %vm1519, %v1517, %v1514
        %v1521 = vadd.f32 %v873, 1.0
        %v1522 = vlog2.pop %v1521
        %v1523 = vmul.f32 %v1522, 0.6931472
        %v1524 = vmul.f32 -0.5, %v873
        %v1525 = vadd.f32 %v1524, 1.0
        %v1526 = vmul.f32 %v1525, %v873
        %v1527 = vand.u32 2147483647, %v873
        %vm1528 = vcmp.lt.f32.partialorder %v1527, 0.0004427343
        %v1529 = vsel %vm1528, %v1526, %v1523
        %v1530 = vadd.f32 %v875, 1.0
        %v1531 = vlog2.pop %v1530
        %v1532 = vmul.f32 %v1531, 0.6931472
        %v1533 = vmul.f32 -0.5, %v875
        %v1534 = vadd.f32 %v1533, 1.0
        %v1535 = vmul.f32 %v1534, %v875
        %v1536 = vand.u32 2147483647, %v875
        %vm1537 = vcmp.lt.f32.partialorder %v1536, 0.0004427343
        %v1538 = vsel %vm1537, %v1535, %v1532
        %v1539 = vadd.f32 %v877, 1.0
        %v1540 = vlog2.pop %v1539
        %v1541 = vmul.f32 %v1540, 0.6931472
        %v1542 = vmul.f32 -0.5, %v877
        %v1543 = vadd.f32 %v1542, 1.0
        %v1544 = vmul.f32 %v1543, %v877
        %v1545 = vand.u32 2147483647, %v877
        %vm1546 = vcmp.lt.f32.partialorder %v1545, 0.0004427343
        %v1547 = vsel %vm1546, %v1544, %v1541
        %v1548 = vadd.f32 %v879, 1.0
        %v1549 = vlog2.pop %v1548
        %v1550 = vmul.f32 %v1549, 0.6931472
        %v1551 = vmul.f32 -0.5, %v879
        %v1552 = vadd.f32 %v1551, 1.0
        %v1553 = vmul.f32 %v1552, %v879
        %v1554 = vand.u32 2147483647, %v879
        %vm1555 = vcmp.lt.f32.partialorder %v1554, 0.0004427343
        %v1556 = vsel %vm1555, %v1553, %v1550
        %v1557 = vadd.f32 %v881, 1.0
        %v1558 = vlog2.pop %v1557
        %v1559 = vmul.f32 %v1558, 0.6931472
        %v1560 = vmul.f32 -0.5, %v881
        %v1561 = vadd.f32 %v1560, 1.0
        %v1562 = vmul.f32 %v1561, %v881
        %v1563 = vand.u32 2147483647, %v881
        %vm1564 = vcmp.lt.f32.partialorder %v1563, 0.0004427343
        %v1565 = vsel %vm1564, %v1562, %v1559
        %v1566 = vadd.f32 %v883, 1.0
        %v1567 = vlog2.pop %v1566
        %v1568 = vmul.f32 %v1567, 0.6931472
        %v1569 = vmul.f32 -0.5, %v883
        %v1570 = vadd.f32 %v1569, 1.0
        %v1571 = vmul.f32 %v1570, %v883
        %v1572 = vand.u32 2147483647, %v883
        %vm1573 = vcmp.lt.f32.partialorder %v1572, 0.0004427343
        %v1574 = vsel %vm1573, %v1571, %v1568
        %v1575 = vadd.f32 %v885, 1.0
        %v1576 = vlog2.pop %v1575
        %v1577 = vmul.f32 %v1576, 0.6931472
        %v1578 = vmul.f32 -0.5, %v885
        %v1579 = vadd.f32 %v1578, 1.0
        %v1580 = vmul.f32 %v1579, %v885
        %v1581 = vand.u32 2147483647, %v885
        %vm1582 = vcmp.lt.f32.partialorder %v1581, 0.0004427343
        %v1583 = vsel %vm1582, %v1580, %v1577
        %v1584 = vadd.f32 %v887, 1.0
        %v1585 = vlog2.pop %v1584
        %v1586 = vmul.f32 %v1585, 0.6931472
        %v1587 = vmul.f32 -0.5, %v887
        %v1588 = vadd.f32 %v1587, 1.0
        %v1589 = vmul.f32 %v1588, %v887
        %v1590 = vand.u32 2147483647, %v887
        %vm1591 = vcmp.lt.f32.partialorder %v1590, 0.0004427343
        %v1592 = vsel %vm1591, %v1589, %v1586
        %v1593 = vadd.f32 %v889, 1.0
        %v1594 = vlog2.pop %v1593
        %v1595 = vmul.f32 %v1594, 0.6931472
        %v1596 = vmul.f32 -0.5, %v889
        %v1597 = vadd.f32 %v1596, 1.0
        %v1598 = vmul.f32 %v1597, %v889
        %v1599 = vand.u32 2147483647, %v889
        %vm1600 = vcmp.lt.f32.partialorder %v1599, 0.0004427343
        %v1601 = vsel %vm1600, %v1598, %v1595
        %v1602 = vadd.f32 %v891, 1.0
        %v1603 = vlog2.pop %v1602
        %v1604 = vmul.f32 %v1603, 0.6931472
        %v1605 = vmul.f32 -0.5, %v891
        %v1606 = vadd.f32 %v1605, 1.0
        %v1607 = vmul.f32 %v1606, %v891
        %v1608 = vand.u32 2147483647, %v891
        %vm1609 = vcmp.lt.f32.partialorder %v1608, 0.0004427343
        %v1610 = vsel %vm1609, %v1607, %v1604
        %v1611 = vadd.f32 %v893, 1.0
        %v1612 = vlog2.pop %v1611
        %v1613 = vmul.f32 %v1612, 0.6931472
        %v1614 = vmul.f32 -0.5, %v893
        %v1615 = vadd.f32 %v1614, 1.0
        %v1616 = vmul.f32 %v1615, %v893
        %v1617 = vand.u32 2147483647, %v893
        %vm1618 = vcmp.lt.f32.partialorder %v1617, 0.0004427343
        %v1619 = vsel %vm1618, %v1616, %v1613
        %v1620 = vadd.f32 %v895, 1.0
        %v1621 = vlog2.pop %v1620
        %v1622 = vmul.f32 %v1621, 0.6931472
        %v1623 = vmul.f32 -0.5, %v895
        %v1624 = vadd.f32 %v1623, 1.0
        %v1625 = vmul.f32 %v1624, %v895
        %v1626 = vand.u32 2147483647, %v895
        %vm1627 = vcmp.lt.f32.partialorder %v1626, 0.0004427343
        %v1628 = vsel %vm1627, %v1625, %v1622
        %v1629 = vadd.f32 %v897, 1.0
        %v1630 = vlog2.pop %v1629
        %v1631 = vmul.f32 %v1630, 0.6931472
        %v1632 = vmul.f32 -0.5, %v897
        %v1633 = vadd.f32 %v1632, 1.0
        %v1634 = vmul.f32 %v1633, %v897
        %v1635 = vand.u32 2147483647, %v897
        %vm1636 = vcmp.lt.f32.partialorder %v1635, 0.0004427343
        %v1637 = vsel %vm1636, %v1634, %v1631
        %v1638 = vadd.f32 %v899, 1.0
        %v1639 = vlog2.pop %v1638
        %v1640 = vmul.f32 %v1639, 0.6931472
        %v1641 = vmul.f32 -0.5, %v899
        %v1642 = vadd.f32 %v1641, 1.0
        %v1643 = vmul.f32 %v1642, %v899
        %v1644 = vand.u32 2147483647, %v899
        %vm1645 = vcmp.lt.f32.partialorder %v1644, 0.0004427343
        %v1646 = vsel %vm1645, %v1643, %v1640
        %v1647 = vadd.f32 %v901, 1.0
        %v1648 = vlog2.pop %v1647
        %v1649 = vmul.f32 %v1648, 0.6931472
        %v1650 = vmul.f32 -0.5, %v901
        %v1651 = vadd.f32 %v1650, 1.0
        %v1652 = vmul.f32 %v1651, %v901
        %v1653 = vand.u32 2147483647, %v901
        %vm1654 = vcmp.lt.f32.partialorder %v1653, 0.0004427343
        %v1655 = vsel %vm1654, %v1652, %v1649
        %v1656 = vadd.f32 %v903, 1.0
        %v1657 = vlog2.pop %v1656
        %v1658 = vmul.f32 %v1657, 0.6931472
        %v1659 = vmul.f32 -0.5, %v903
        %v1660 = vadd.f32 %v1659, 1.0
        %v1661 = vmul.f32 %v1660, %v903
        %v1662 = vand.u32 2147483647, %v903
        %vm1663 = vcmp.lt.f32.partialorder %v1662, 0.0004427343
        %v1664 = vsel %vm1663, %v1661, %v1658
        %v1665 = vadd.f32 %v905, 1.0
        %v1666 = vlog2.pop %v1665
        %v1667 = vmul.f32 %v1666, 0.6931472
        %v1668 = vmul.f32 -0.5, %v905
        %v1669 = vadd.f32 %v1668, 1.0
        %v1670 = vmul.f32 %v1669, %v905
        %v1671 = vand.u32 2147483647, %v905
        %vm1672 = vcmp.lt.f32.partialorder %v1671, 0.0004427343
        %v1673 = vsel %vm1672, %v1670, %v1667
        %v1674 = vadd.f32 %v907, 1.0
        %v1675 = vlog2.pop %v1674
        %v1676 = vmul.f32 %v1675, 0.6931472
        %v1677 = vmul.f32 -0.5, %v907
        %v1678 = vadd.f32 %v1677, 1.0
        %v1679 = vmul.f32 %v1678, %v907
        %v1680 = vand.u32 2147483647, %v907
        %vm1681 = vcmp.lt.f32.partialorder %v1680, 0.0004427343
        %v1682 = vsel %vm1681, %v1679, %v1676
        %v1683 = vadd.f32 %v909, 1.0
        %v1684 = vlog2.pop %v1683
        %v1685 = vmul.f32 %v1684, 0.6931472
        %v1686 = vmul.f32 -0.5, %v909
        %v1687 = vadd.f32 %v1686, 1.0
        %v1688 = vmul.f32 %v1687, %v909
        %v1689 = vand.u32 2147483647, %v909
        %vm1690 = vcmp.lt.f32.partialorder %v1689, 0.0004427343
        %v1691 = vsel %vm1690, %v1688, %v1685
        %v1692 = vadd.f32 %v911, 1.0
        %v1693 = vlog2.pop %v1692
        %v1694 = vmul.f32 %v1693, 0.6931472
        %v1695 = vmul.f32 -0.5, %v911
        %v1696 = vadd.f32 %v1695, 1.0
        %v1697 = vmul.f32 %v1696, %v911
        %v1698 = vand.u32 2147483647, %v911
        %vm1699 = vcmp.lt.f32.partialorder %v1698, 0.0004427343
        %v1700 = vsel %vm1699, %v1697, %v1694
        %v1701 = vadd.f32 %v913, 1.0
        %v1702 = vlog2.pop %v1701
        %v1703 = vmul.f32 %v1702, 0.6931472
        %v1704 = vmul.f32 -0.5, %v913
        %v1705 = vadd.f32 %v1704, 1.0
        %v1706 = vmul.f32 %v1705, %v913
        %v1707 = vand.u32 2147483647, %v913
        %vm1708 = vcmp.lt.f32.partialorder %v1707, 0.0004427343
        %v1709 = vsel %vm1708, %v1706, %v1703
        %v1710 = vadd.f32 %v915, 1.0
        %v1711 = vlog2.pop %v1710
        %v1712 = vmul.f32 %v1711, 0.6931472
        %v1713 = vmul.f32 -0.5, %v915
        %v1714 = vadd.f32 %v1713, 1.0
        %v1715 = vmul.f32 %v1714, %v915
        %v1716 = vand.u32 2147483647, %v915
        %vm1717 = vcmp.lt.f32.partialorder %v1716, 0.0004427343
        %v1718 = vsel %vm1717, %v1715, %v1712
        %v1719 = vadd.f32 %v917, 1.0
        %v1720 = vlog2.pop %v1719
        %v1721 = vmul.f32 %v1720, 0.6931472
        %v1722 = vmul.f32 -0.5, %v917
        %v1723 = vadd.f32 %v1722, 1.0
        %v1724 = vmul.f32 %v1723, %v917
        %v1725 = vand.u32 2147483647, %v917
        %vm1726 = vcmp.lt.f32.partialorder %v1725, 0.0004427343
        %v1727 = vsel %vm1726, %v1724, %v1721
        %v1728 = vadd.f32 %v919, 1.0
        %v1729 = vlog2.pop %v1728
        %v1730 = vmul.f32 %v1729, 0.6931472
        %v1731 = vmul.f32 -0.5, %v919
        %v1732 = vadd.f32 %v1731, 1.0
        %v1733 = vmul.f32 %v1732, %v919
        %v1734 = vand.u32 2147483647, %v919
        %vm1735 = vcmp.lt.f32.partialorder %v1734, 0.0004427343
        %v1736 = vsel %vm1735, %v1733, %v1730
        %v1737 = vadd.f32 %v921, 1.0
        %v1738 = vlog2.pop %v1737
        %v1739 = vmul.f32 %v1738, 0.6931472
        %v1740 = vmul.f32 -0.5, %v921
        %v1741 = vadd.f32 %v1740, 1.0
        %v1742 = vmul.f32 %v1741, %v921
        %v1743 = vand.u32 2147483647, %v921
        %vm1744 = vcmp.lt.f32.partialorder %v1743, 0.0004427343
        %v1745 = vsel %vm1744, %v1742, %v1739
        %v1746 = vadd.f32 %v923, 1.0
        %v1747 = vlog2.pop %v1746
        %v1748 = vmul.f32 %v1747, 0.6931472
        %v1749 = vmul.f32 -0.5, %v923
        %v1750 = vadd.f32 %v1749, 1.0
        %v1751 = vmul.f32 %v1750, %v923
        %v1752 = vand.u32 2147483647, %v923
        %vm1753 = vcmp.lt.f32.partialorder %v1752, 0.0004427343
        %v1754 = vsel %vm1753, %v1751, %v1748
        %v1755 = vadd.f32 %v925, 1.0
        %v1756 = vlog2.pop %v1755
        %v1757 = vmul.f32 %v1756, 0.6931472
        %v1758 = vmul.f32 -0.5, %v925
        %v1759 = vadd.f32 %v1758, 1.0
        %v1760 = vmul.f32 %v1759, %v925
        %v1761 = vand.u32 2147483647, %v925
        %vm1762 = vcmp.lt.f32.partialorder %v1761, 0.0004427343
        %v1763 = vsel %vm1762, %v1760, %v1757
        %v1764 = vadd.f32 %v927, 1.0
        %v1765 = vlog2.pop %v1764
        %v1766 = vmul.f32 %v1765, 0.6931472
        %v1767 = vmul.f32 -0.5, %v927
        %v1768 = vadd.f32 %v1767, 1.0
        %v1769 = vmul.f32 %v1768, %v927
        %v1770 = vand.u32 2147483647, %v927
        %vm1771 = vcmp.lt.f32.partialorder %v1770, 0.0004427343
        %v1772 = vsel %vm1771, %v1769, %v1766
        %v1773 = vadd.f32 %v929, 1.0
        %v1774 = vlog2.pop %v1773
        %v1775 = vmul.f32 %v1774, 0.6931472
        %v1776 = vmul.f32 -0.5, %v929
        %v1777 = vadd.f32 %v1776, 1.0
        %v1778 = vmul.f32 %v1777, %v929
        %v1779 = vand.u32 2147483647, %v929
        %vm1780 = vcmp.lt.f32.partialorder %v1779, 0.0004427343
        %v1781 = vsel %vm1780, %v1778, %v1775
        %v1782 = vadd.f32 %v931, 1.0
        %v1783 = vlog2.pop %v1782
        %v1784 = vmul.f32 %v1783, 0.6931472
        %v1785 = vmul.f32 -0.5, %v931
        %v1786 = vadd.f32 %v1785, 1.0
        %v1787 = vmul.f32 %v1786, %v931
        %v1788 = vand.u32 2147483647, %v931
        %vm1789 = vcmp.lt.f32.partialorder %v1788, 0.0004427343
        %v1790 = vsel %vm1789, %v1787, %v1784
        %v1791 = vadd.f32 %v933, 1.0
        %v1792 = vlog2.pop %v1791
        %v1793 = vmul.f32 %v1792, 0.6931472
        %v1794 = vmul.f32 -0.5, %v933
        %v1795 = vadd.f32 %v1794, 1.0
        %v1796 = vmul.f32 %v1795, %v933
        %v1797 = vand.u32 2147483647, %v933
        %vm1798 = vcmp.lt.f32.partialorder %v1797, 0.0004427343
        %v1799 = vsel %vm1798, %v1796, %v1793
        %v1800 = vadd.f32 %v935, 1.0
        %v1801 = vlog2.pop %v1800
        %v1802 = vmul.f32 %v1801, 0.6931472
        %v1803 = vmul.f32 -0.5, %v935
        %v1804 = vadd.f32 %v1803, 1.0
        %v1805 = vmul.f32 %v1804, %v935
        %v1806 = vand.u32 2147483647, %v935
        %vm1807 = vcmp.lt.f32.partialorder %v1806, 0.0004427343
        %v1808 = vsel %vm1807, %v1805, %v1802
        %v1809 = vadd.f32 %v937, 1.0
        %v1810 = vlog2.pop %v1809
        %v1811 = vmul.f32 %v1810, 0.6931472
        %v1812 = vmul.f32 -0.5, %v937
        %v1813 = vadd.f32 %v1812, 1.0
        %v1814 = vmul.f32 %v1813, %v937
        %v1815 = vand.u32 2147483647, %v937
        %vm1816 = vcmp.lt.f32.partialorder %v1815, 0.0004427343
        %v1817 = vsel %vm1816, %v1814, %v1811
        %v1818 = vadd.f32 %v939, 1.0
        %v1819 = vlog2.pop %v1818
        %v1820 = vmul.f32 %v1819, 0.6931472
        %v1821 = vmul.f32 -0.5, %v939
        %v1822 = vadd.f32 %v1821, 1.0
        %v1823 = vmul.f32 %v1822, %v939
        %v1824 = vand.u32 2147483647, %v939
        %vm1825 = vcmp.lt.f32.partialorder %v1824, 0.0004427343
        %v1826 = vsel %vm1825, %v1823, %v1820
        %v1827 = vadd.f32 %v941, 1.0
        %v1828 = vlog2.pop %v1827
        %v1829 = vmul.f32 %v1828, 0.6931472
        %v1830 = vmul.f32 -0.5, %v941
        %v1831 = vadd.f32 %v1830, 1.0
        %v1832 = vmul.f32 %v1831, %v941
        %v1833 = vand.u32 2147483647, %v941
        %vm1834 = vcmp.lt.f32.partialorder %v1833, 0.0004427343
        %v1835 = vsel %vm1834, %v1832, %v1829
        %v1836 = vadd.f32 %v943, 1.0
        %v1837 = vlog2.pop %v1836
        %v1838 = vmul.f32 %v1837, 0.6931472
        %v1839 = vmul.f32 -0.5, %v943
        %v1840 = vadd.f32 %v1839, 1.0
        %v1841 = vmul.f32 %v1840, %v943
        %v1842 = vand.u32 2147483647, %v943
        %vm1843 = vcmp.lt.f32.partialorder %v1842, 0.0004427343
        %v1844 = vsel %vm1843, %v1841, %v1838
        %v1845 = vadd.f32 %v945, 1.0
        %v1846 = vlog2.pop %v1845
        %v1847 = vmul.f32 %v1846, 0.6931472
        %v1848 = vmul.f32 -0.5, %v945
        %v1849 = vadd.f32 %v1848, 1.0
        %v1850 = vmul.f32 %v1849, %v945
        %v1851 = vand.u32 2147483647, %v945
        %vm1852 = vcmp.lt.f32.partialorder %v1851, 0.0004427343
        %v1853 = vsel %vm1852, %v1850, %v1847
        %v1854 = vadd.f32 %v947, 1.0
        %v1855 = vlog2.pop %v1854
        %v1856 = vmul.f32 %v1855, 0.6931472
        %v1857 = vmul.f32 -0.5, %v947
        %v1858 = vadd.f32 %v1857, 1.0
        %v1859 = vmul.f32 %v1858, %v947
        %v1860 = vand.u32 2147483647, %v947
        %vm1861 = vcmp.lt.f32.partialorder %v1860, 0.0004427343
        %v1862 = vsel %vm1861, %v1859, %v1856
        %v1863 = vadd.f32 %v949, 1.0
        %v1864 = vlog2.pop %v1863
        %v1865 = vmul.f32 %v1864, 0.6931472
        %v1866 = vmul.f32 -0.5, %v949
        %v1867 = vadd.f32 %v1866, 1.0
        %v1868 = vmul.f32 %v1867, %v949
        %v1869 = vand.u32 2147483647, %v949
        %vm1870 = vcmp.lt.f32.partialorder %v1869, 0.0004427343
        %v1871 = vsel %vm1870, %v1868, %v1865
        %v1872 = vadd.f32 %v951, 1.0
        %v1873 = vlog2.pop %v1872
        %v1874 = vmul.f32 %v1873, 0.6931472
        %v1875 = vmul.f32 -0.5, %v951
        %v1876 = vadd.f32 %v1875, 1.0
        %v1877 = vmul.f32 %v1876, %v951
        %v1878 = vand.u32 2147483647, %v951
        %vm1879 = vcmp.lt.f32.partialorder %v1878, 0.0004427343
        %v1880 = vsel %vm1879, %v1877, %v1874
        %v1881 = vadd.f32 %v953, 1.0
        %v1882 = vlog2.pop %v1881
        %v1883 = vmul.f32 %v1882, 0.6931472
        %v1884 = vmul.f32 -0.5, %v953
        %v1885 = vadd.f32 %v1884, 1.0
        %v1886 = vmul.f32 %v1885, %v953
        %v1887 = vand.u32 2147483647, %v953
        %vm1888 = vcmp.lt.f32.partialorder %v1887, 0.0004427343
        %v1889 = vsel %vm1888, %v1886, %v1883
        %v1890 = vadd.f32 %v955, 1.0
        %v1891 = vlog2.pop %v1890
        %v1892 = vmul.f32 %v1891, 0.6931472
        %v1893 = vmul.f32 -0.5, %v955
        %v1894 = vadd.f32 %v1893, 1.0
        %v1895 = vmul.f32 %v1894, %v955
        %v1896 = vand.u32 2147483647, %v955
        %vm1897 = vcmp.lt.f32.partialorder %v1896, 0.0004427343
        %v1898 = vsel %vm1897, %v1895, %v1892
        %v1899 = vadd.f32 %v957, 1.0
        %v1900 = vlog2.pop %v1899
        %v1901 = vmul.f32 %v1900, 0.6931472
        %v1902 = vmul.f32 -0.5, %v957
        %v1903 = vadd.f32 %v1902, 1.0
        %v1904 = vmul.f32 %v1903, %v957
        %v1905 = vand.u32 2147483647, %v957
        %vm1906 = vcmp.lt.f32.partialorder %v1905, 0.0004427343
        %v1907 = vsel %vm1906, %v1904, %v1901
        %v1908 = vadd.f32 %v959, 1.0
        %v1909 = vlog2.pop %v1908
        %v1910 = vmul.f32 %v1909, 0.6931472
        %v1911 = vmul.f32 -0.5, %v959
        %v1912 = vadd.f32 %v1911, 1.0
        %v1913 = vmul.f32 %v1912, %v959
        %v1914 = vand.u32 2147483647, %v959
        %vm1915 = vcmp.lt.f32.partialorder %v1914, 0.0004427343
        %v1916 = vsel %vm1915, %v1913, %v1910
        %v1917 = vadd.f32 %v961, 1.0
        %v1918 = vlog2.pop %v1917
        %v1919 = vmul.f32 %v1918, 0.6931472
        %v1920 = vmul.f32 -0.5, %v961
        %v1921 = vadd.f32 %v1920, 1.0
        %v1922 = vmul.f32 %v1921, %v961
        %v1923 = vand.u32 2147483647, %v961
        %vm1924 = vcmp.lt.f32.partialorder %v1923, 0.0004427343
        %v1925 = vsel %vm1924, %v1922, %v1919
        %v1926 = vadd.f32 %v963, 1.0
        %v1927 = vlog2.pop %v1926
        %v1928 = vmul.f32 %v1927, 0.6931472
        %v1929 = vmul.f32 -0.5, %v963
        %v1930 = vadd.f32 %v1929, 1.0
        %v1931 = vmul.f32 %v1930, %v963
        %v1932 = vand.u32 2147483647, %v963
        %vm1933 = vcmp.lt.f32.partialorder %v1932, 0.0004427343
        %v1934 = vsel %vm1933, %v1931, %v1928
        %v1935 = vadd.f32 %v965, 1.0
        %v1936 = vlog2.pop %v1935
        %v1937 = vmul.f32 %v1936, 0.6931472
        %v1938 = vmul.f32 -0.5, %v965
        %v1939 = vadd.f32 %v1938, 1.0
        %v1940 = vmul.f32 %v1939, %v965
        %v1941 = vand.u32 2147483647, %v965
        %vm1942 = vcmp.lt.f32.partialorder %v1941, 0.0004427343
        %v1943 = vsel %vm1942, %v1940, %v1937
        %v1944 = vadd.f32 %v967, 1.0
        %v1945 = vlog2.pop %v1944
        %v1946 = vmul.f32 %v1945, 0.6931472
        %v1947 = vmul.f32 -0.5, %v967
        %v1948 = vadd.f32 %v1947, 1.0
        %v1949 = vmul.f32 %v1948, %v967
        %v1950 = vand.u32 2147483647, %v967
        %vm1951 = vcmp.lt.f32.partialorder %v1950, 0.0004427343
        %v1952 = vsel %vm1951, %v1949, %v1946
        %v1953 = vadd.f32 %v969, 1.0
        %v1954 = vlog2.pop %v1953
        %v1955 = vmul.f32 %v1954, 0.6931472
        %v1956 = vmul.f32 -0.5, %v969
        %v1957 = vadd.f32 %v1956, 1.0
        %v1958 = vmul.f32 %v1957, %v969
        %v1959 = vand.u32 2147483647, %v969
        %vm1960 = vcmp.lt.f32.partialorder %v1959, 0.0004427343
        %v1961 = vsel %vm1960, %v1958, %v1955
        %v1962 = vadd.f32 %v971, 1.0
        %v1963 = vlog2.pop %v1962
        %v1964 = vmul.f32 %v1963, 0.6931472
        %v1965 = vmul.f32 -0.5, %v971
        %v1966 = vadd.f32 %v1965, 1.0
        %v1967 = vmul.f32 %v1966, %v971
        %v1968 = vand.u32 2147483647, %v971
        %vm1969 = vcmp.lt.f32.partialorder %v1968, 0.0004427343
        %v1970 = vsel %vm1969, %v1967, %v1964
        %v1971 = vadd.f32 %v973, 1.0
        %v1972 = vlog2.pop %v1971
        %v1973 = vmul.f32 %v1972, 0.6931472
        %v1974 = vmul.f32 -0.5, %v973
        %v1975 = vadd.f32 %v1974, 1.0
        %v1976 = vmul.f32 %v1975, %v973
        %v1977 = vand.u32 2147483647, %v973
        %vm1978 = vcmp.lt.f32.partialorder %v1977, 0.0004427343
        %v1979 = vsel %vm1978, %v1976, %v1973
        %v1980 = vadd.f32 %v975, 1.0
        %v1981 = vlog2.pop %v1980
        %v1982 = vmul.f32 %v1981, 0.6931472
        %v1983 = vmul.f32 -0.5, %v975
        %v1984 = vadd.f32 %v1983, 1.0
        %v1985 = vmul.f32 %v1984, %v975
        %v1986 = vand.u32 2147483647, %v975
        %vm1987 = vcmp.lt.f32.partialorder %v1986, 0.0004427343
        %v1988 = vsel %vm1987, %v1985, %v1982
        %v1989 = vadd.f32 %v977, 1.0
        %v1990 = vlog2.pop %v1989
        %v1991 = vmul.f32 %v1990, 0.6931472
        %v1992 = vmul.f32 -0.5, %v977
        %v1993 = vadd.f32 %v1992, 1.0
        %v1994 = vmul.f32 %v1993, %v977
        %v1995 = vand.u32 2147483647, %v977
        %vm1996 = vcmp.lt.f32.partialorder %v1995, 0.0004427343
        %v1997 = vsel %vm1996, %v1994, %v1991
        %v1998 = vadd.f32 %v979, 1.0
        %v1999 = vlog2.pop %v1998
        %v2000 = vmul.f32 %v1999, 0.6931472
        %v2001 = vmul.f32 -0.5, %v979
        %v2002 = vadd.f32 %v2001, 1.0
        %v2003 = vmul.f32 %v2002, %v979
        %v2004 = vand.u32 2147483647, %v979
        %vm2005 = vcmp.lt.f32.partialorder %v2004, 0.0004427343
        %v2006 = vsel %vm2005, %v2003, %v2000
        %v2007 = vadd.f32 %v981, 1.0
        %v2008 = vlog2.pop %v2007
        %v2009 = vmul.f32 %v2008, 0.6931472
        %v2010 = vmul.f32 -0.5, %v981
        %v2011 = vadd.f32 %v2010, 1.0
        %v2012 = vmul.f32 %v2011, %v981
        %v2013 = vand.u32 2147483647, %v981
        %vm2014 = vcmp.lt.f32.partialorder %v2013, 0.0004427343
        %v2015 = vsel %vm2014, %v2012, %v2009
        %v2016 = vadd.f32 %v983, 1.0
        %v2017 = vlog2.pop %v2016
        %v2018 = vmul.f32 %v2017, 0.6931472
        %v2019 = vmul.f32 -0.5, %v983
        %v2020 = vadd.f32 %v2019, 1.0
        %v2021 = vmul.f32 %v2020, %v983
        %v2022 = vand.u32 2147483647, %v983
        %vm2023 = vcmp.lt.f32.partialorder %v2022, 0.0004427343
        %v2024 = vsel %vm2023, %v2021, %v2018
        %v2025 = vadd.f32 %v985, 1.0
        %v2026 = vlog2.pop %v2025
        %v2027 = vmul.f32 %v2026, 0.6931472
        %v2028 = vmul.f32 -0.5, %v985
        %v2029 = vadd.f32 %v2028, 1.0
        %v2030 = vmul.f32 %v2029, %v985
        %v2031 = vand.u32 2147483647, %v985
        %vm2032 = vcmp.lt.f32.partialorder %v2031, 0.0004427343
        %v2033 = vsel %vm2032, %v2030, %v2027
        %v2034 = vadd.f32 %v987, 1.0
        %v2035 = vlog2.pop %v2034
        %v2036 = vmul.f32 %v2035, 0.6931472
        %v2037 = vmul.f32 -0.5, %v987
        %v2038 = vadd.f32 %v2037, 1.0
        %v2039 = vmul.f32 %v2038, %v987
        %v2040 = vand.u32 2147483647, %v987
        %vm2041 = vcmp.lt.f32.partialorder %v2040, 0.0004427343
        %v2042 = vsel %vm2041, %v2039, %v2036
        %v2043 = vadd.f32 %v989, 1.0
        %v2044 = vlog2.pop %v2043
        %v2045 = vmul.f32 %v2044, 0.6931472
        %v2046 = vmul.f32 -0.5, %v989
        %v2047 = vadd.f32 %v2046, 1.0
        %v2048 = vmul.f32 %v2047, %v989
        %v2049 = vand.u32 2147483647, %v989
        %vm2050 = vcmp.lt.f32.partialorder %v2049, 0.0004427343
        %v2051 = vsel %vm2050, %v2048, %v2045
        %v2052 = vadd.f32 %v991, 1.0
        %v2053 = vlog2.pop %v2052
        %v2054 = vmul.f32 %v2053, 0.6931472
        %v2055 = vmul.f32 -0.5, %v991
        %v2056 = vadd.f32 %v2055, 1.0
        %v2057 = vmul.f32 %v2056, %v991
        %v2058 = vand.u32 2147483647, %v991
        %vm2059 = vcmp.lt.f32.partialorder %v2058, 0.0004427343
        %v2060 = vsel %vm2059, %v2057, %v2054
        %v2061 = vadd.f32 %v993, 1.0
        %v2062 = vlog2.pop %v2061
        %v2063 = vmul.f32 %v2062, 0.6931472
        %v2064 = vmul.f32 -0.5, %v993
        %v2065 = vadd.f32 %v2064, 1.0
        %v2066 = vmul.f32 %v2065, %v993
        %v2067 = vand.u32 2147483647, %v993
        %vm2068 = vcmp.lt.f32.partialorder %v2067, 0.0004427343
        %v2069 = vsel %vm2068, %v2066, %v2063
        %v2070 = vadd.f32 %v995, 1.0
        %v2071 = vlog2.pop %v2070
        %v2072 = vmul.f32 %v2071, 0.6931472
        %v2073 = vmul.f32 -0.5, %v995
        %v2074 = vadd.f32 %v2073, 1.0
        %v2075 = vmul.f32 %v2074, %v995
        %v2076 = vand.u32 2147483647, %v995
        %vm2077 = vcmp.lt.f32.partialorder %v2076, 0.0004427343
        %v2078 = vsel %vm2077, %v2075, %v2072
        %v2079 = vadd.f32 %v997, 1.0
        %v2080 = vlog2.pop %v2079
        %v2081 = vmul.f32 %v2080, 0.6931472
        %v2082 = vmul.f32 -0.5, %v997
        %v2083 = vadd.f32 %v2082, 1.0
        %v2084 = vmul.f32 %v2083, %v997
        %v2085 = vand.u32 2147483647, %v997
        %vm2086 = vcmp.lt.f32.partialorder %v2085, 0.0004427343
        %v2087 = vsel %vm2086, %v2084, %v2081
        %v2088 = vadd.f32 %v999, 1.0
        %v2089 = vlog2.pop %v2088
        %v2090 = vmul.f32 %v2089, 0.6931472
        %v2091 = vmul.f32 -0.5, %v999
        %v2092 = vadd.f32 %v2091, 1.0
        %v2093 = vmul.f32 %v2092, %v999
        %v2094 = vand.u32 2147483647, %v999
        %vm2095 = vcmp.lt.f32.partialorder %v2094, 0.0004427343
        %v2096 = vsel %vm2095, %v2093, %v2090
        %v2097 = vadd.f32 %v1001, 1.0
        %v2098 = vlog2.pop %v2097
        %v2099 = vmul.f32 %v2098, 0.6931472
        %v2100 = vmul.f32 -0.5, %v1001
        %v2101 = vadd.f32 %v2100, 1.0
        %v2102 = vmul.f32 %v2101, %v1001
        %v2103 = vand.u32 2147483647, %v1001
        %vm2104 = vcmp.lt.f32.partialorder %v2103, 0.0004427343
        %v2105 = vsel %vm2104, %v2102, %v2099
        %v2106 = vadd.f32 %v1003, 1.0
        %v2107 = vlog2.pop %v2106
        %v2108 = vmul.f32 %v2107, 0.6931472
        %v2109 = vmul.f32 -0.5, %v1003
        %v2110 = vadd.f32 %v2109, 1.0
        %v2111 = vmul.f32 %v2110, %v1003
        %v2112 = vand.u32 2147483647, %v1003
        %vm2113 = vcmp.lt.f32.partialorder %v2112, 0.0004427343
        %v2114 = vsel %vm2113, %v2111, %v2108
        %v2115 = vadd.f32 %v1005, 1.0
        %v2116 = vlog2.pop %v2115
        %v2117 = vmul.f32 %v2116, 0.6931472
        %v2118 = vmul.f32 -0.5, %v1005
        %v2119 = vadd.f32 %v2118, 1.0
        %v2120 = vmul.f32 %v2119, %v1005
        %v2121 = vand.u32 2147483647, %v1005
        %vm2122 = vcmp.lt.f32.partialorder %v2121, 0.0004427343
        %v2123 = vsel %vm2122, %v2120, %v2117
        %v2124 = vadd.f32 %v1007, 1.0
        %v2125 = vlog2.pop %v2124
        %v2126 = vmul.f32 %v2125, 0.6931472
        %v2127 = vmul.f32 -0.5, %v1007
        %v2128 = vadd.f32 %v2127, 1.0
        %v2129 = vmul.f32 %v2128, %v1007
        %v2130 = vand.u32 2147483647, %v1007
        %vm2131 = vcmp.lt.f32.partialorder %v2130, 0.0004427343
        %v2132 = vsel %vm2131, %v2129, %v2126
        %v2133 = vadd.f32 %v1009, 1.0
        %v2134 = vlog2.pop %v2133
        %v2135 = vmul.f32 %v2134, 0.6931472
        %v2136 = vmul.f32 -0.5, %v1009
        %v2137 = vadd.f32 %v2136, 1.0
        %v2138 = vmul.f32 %v2137, %v1009
        %v2139 = vand.u32 2147483647, %v1009
        %vm2140 = vcmp.lt.f32.partialorder %v2139, 0.0004427343
        %v2141 = vsel %vm2140, %v2138, %v2135
        %v2142 = vadd.f32 %v1011, 1.0
        %v2143 = vlog2.pop %v2142
        %v2144 = vmul.f32 %v2143, 0.6931472
        %v2145 = vmul.f32 -0.5, %v1011
        %v2146 = vadd.f32 %v2145, 1.0
        %v2147 = vmul.f32 %v2146, %v1011
        %v2148 = vand.u32 2147483647, %v1011
        %vm2149 = vcmp.lt.f32.partialorder %v2148, 0.0004427343
        %v2150 = vsel %vm2149, %v2147, %v2144
        %v2151 = vadd.f32 %v1013, 1.0
        %v2152 = vlog2.pop %v2151
        %v2153 = vmul.f32 %v2152, 0.6931472
        %v2154 = vmul.f32 -0.5, %v1013
        %v2155 = vadd.f32 %v2154, 1.0
        %v2156 = vmul.f32 %v2155, %v1013
        %v2157 = vand.u32 2147483647, %v1013
        %vm2158 = vcmp.lt.f32.partialorder %v2157, 0.0004427343
        %v2159 = vsel %vm2158, %v2156, %v2153
        %v2160 = vadd.f32 %v1015, 1.0
        %v2161 = vlog2.pop %v2160
        %v2162 = vmul.f32 %v2161, 0.6931472
        %v2163 = vmul.f32 -0.5, %v1015
        %v2164 = vadd.f32 %v2163, 1.0
        %v2165 = vmul.f32 %v2164, %v1015
        %v2166 = vand.u32 2147483647, %v1015
        %vm2167 = vcmp.lt.f32.partialorder %v2166, 0.0004427343
        %v2168 = vsel %vm2167, %v2165, %v2162
        %v2169 = vadd.f32 %v1017, 1.0
        %v2170 = vlog2.pop %v2169
        %v2171 = vmul.f32 %v2170, 0.6931472
        %v2172 = vmul.f32 -0.5, %v1017
        %v2173 = vadd.f32 %v2172, 1.0
        %v2174 = vmul.f32 %v2173, %v1017
        %v2175 = vand.u32 2147483647, %v1017
        %vm2176 = vcmp.lt.f32.partialorder %v2175, 0.0004427343
        %v2177 = vsel %vm2176, %v2174, %v2171
        %v2178 = vadd.f32 %v1019, 1.0
        %v2179 = vlog2.pop %v2178
        %v2180 = vmul.f32 %v2179, 0.6931472
        %v2181 = vmul.f32 -0.5, %v1019
        %v2182 = vadd.f32 %v2181, 1.0
        %v2183 = vmul.f32 %v2182, %v1019
        %v2184 = vand.u32 2147483647, %v1019
        %vm2185 = vcmp.lt.f32.partialorder %v2184, 0.0004427343
        %v2186 = vsel %vm2185, %v2183, %v2180
        %v2187 = vadd.f32 %v1021, 1.0
        %v2188 = vlog2.pop %v2187
        %v2189 = vmul.f32 %v2188, 0.6931472
        %v2190 = vmul.f32 -0.5, %v1021
        %v2191 = vadd.f32 %v2190, 1.0
        %v2192 = vmul.f32 %v2191, %v1021
        %v2193 = vand.u32 2147483647, %v1021
        %vm2194 = vcmp.lt.f32.partialorder %v2193, 0.0004427343
        %v2195 = vsel %vm2194, %v2192, %v2189
        %v2196 = vadd.f32 %v1023, 1.0
        %v2197 = vlog2.pop %v2196
        %v2198 = vmul.f32 %v2197, 0.6931472
        %v2199 = vmul.f32 -0.5, %v1023
        %v2200 = vadd.f32 %v2199, 1.0
        %v2201 = vmul.f32 %v2200, %v1023
        %v2202 = vand.u32 2147483647, %v1023
        %vm2203 = vcmp.lt.f32.partialorder %v2202, 0.0004427343
        %v2204 = vsel %vm2203, %v2201, %v2198
        %v2205 = vadd.f32 %v1025, 1.0
        %v2206 = vlog2.pop %v2205
        %v2207 = vmul.f32 %v2206, 0.6931472
        %v2208 = vmul.f32 -0.5, %v1025
        %v2209 = vadd.f32 %v2208, 1.0
        %v2210 = vmul.f32 %v2209, %v1025
        %v2211 = vand.u32 2147483647, %v1025
        %vm2212 = vcmp.lt.f32.partialorder %v2211, 0.0004427343
        %v2213 = vsel %vm2212, %v2210, %v2207
        %v2214 = vadd.f32 %v1027, 1.0
        %v2215 = vlog2.pop %v2214
        %v2216 = vmul.f32 %v2215, 0.6931472
        %v2217 = vmul.f32 -0.5, %v1027
        %v2218 = vadd.f32 %v2217, 1.0
        %v2219 = vmul.f32 %v2218, %v1027
        %v2220 = vand.u32 2147483647, %v1027
        %vm2221 = vcmp.lt.f32.partialorder %v2220, 0.0004427343
        %v2222 = vsel %vm2221, %v2219, %v2216
        %v2223 = vadd.f32 %v1029, 1.0
        %v2224 = vlog2.pop %v2223
        %v2225 = vmul.f32 %v2224, 0.6931472
        %v2226 = vmul.f32 -0.5, %v1029
        %v2227 = vadd.f32 %v2226, 1.0
        %v2228 = vmul.f32 %v2227, %v1029
        %v2229 = vand.u32 2147483647, %v1029
        %vm2230 = vcmp.lt.f32.partialorder %v2229, 0.0004427343
        %v2231 = vsel %vm2230, %v2228, %v2225
        %v2232 = vadd.f32 %v1031, 1.0
        %v2233 = vlog2.pop %v2232
        %v2234 = vmul.f32 %v2233, 0.6931472
        %v2235 = vmul.f32 -0.5, %v1031
        %v2236 = vadd.f32 %v2235, 1.0
        %v2237 = vmul.f32 %v2236, %v1031
        %v2238 = vand.u32 2147483647, %v1031
        %vm2239 = vcmp.lt.f32.partialorder %v2238, 0.0004427343
        %v2240 = vsel %vm2239, %v2237, %v2234
        %v2241 = vadd.f32 %v1033, 1.0
        %v2242 = vlog2.pop %v2241
        %v2243 = vmul.f32 %v2242, 0.6931472
        %v2244 = vmul.f32 -0.5, %v1033
        %v2245 = vadd.f32 %v2244, 1.0
        %v2246 = vmul.f32 %v2245, %v1033
        %v2247 = vand.u32 2147483647, %v1033
        %vm2248 = vcmp.lt.f32.partialorder %v2247, 0.0004427343
        %v2249 = vsel %vm2248, %v2246, %v2243
        %v2250 = vadd.f32 %v1035, 1.0
        %v2251 = vlog2.pop %v2250
        %v2252 = vmul.f32 %v2251, 0.6931472
        %v2253 = vmul.f32 -0.5, %v1035
        %v2254 = vadd.f32 %v2253, 1.0
        %v2255 = vmul.f32 %v2254, %v1035
        %v2256 = vand.u32 2147483647, %v1035
        %vm2257 = vcmp.lt.f32.partialorder %v2256, 0.0004427343
        %v2258 = vsel %vm2257, %v2255, %v2252
        %v2259 = vadd.f32 %v1037, 1.0
        %v2260 = vlog2.pop %v2259
        %v2261 = vmul.f32 %v2260, 0.6931472
        %v2262 = vmul.f32 -0.5, %v1037
        %v2263 = vadd.f32 %v2262, 1.0
        %v2264 = vmul.f32 %v2263, %v1037
        %v2265 = vand.u32 2147483647, %v1037
        %vm2266 = vcmp.lt.f32.partialorder %v2265, 0.0004427343
        %v2267 = vsel %vm2266, %v2264, %v2261
        %v2268 = vadd.f32 %v1039, 1.0
        %v2269 = vlog2.pop %v2268
        %v2270 = vmul.f32 %v2269, 0.6931472
        %v2271 = vmul.f32 -0.5, %v1039
        %v2272 = vadd.f32 %v2271, 1.0
        %v2273 = vmul.f32 %v2272, %v1039
        %v2274 = vand.u32 2147483647, %v1039
        %vm2275 = vcmp.lt.f32.partialorder %v2274, 0.0004427343
        %v2276 = vsel %vm2275, %v2273, %v2270
        %v2277 = vadd.f32 %v1041, 1.0
        %v2278 = vlog2.pop %v2277
        %v2279 = vmul.f32 %v2278, 0.6931472
        %v2280 = vmul.f32 -0.5, %v1041
        %v2281 = vadd.f32 %v2280, 1.0
        %v2282 = vmul.f32 %v2281, %v1041
        %v2283 = vand.u32 2147483647, %v1041
        %vm2284 = vcmp.lt.f32.partialorder %v2283, 0.0004427343
        %v2285 = vsel %vm2284, %v2282, %v2279
        %v2286 = vadd.f32 %v1043, 1.0
        %v2287 = vlog2.pop %v2286
        %v2288 = vmul.f32 %v2287, 0.6931472
        %v2289 = vmul.f32 -0.5, %v1043
        %v2290 = vadd.f32 %v2289, 1.0
        %v2291 = vmul.f32 %v2290, %v1043
        %v2292 = vand.u32 2147483647, %v1043
        %vm2293 = vcmp.lt.f32.partialorder %v2292, 0.0004427343
        %v2294 = vsel %vm2293, %v2291, %v2288
        %v2295 = vadd.f32 %v1045, 1.0
        %v2296 = vlog2.pop %v2295
        %v2297 = vmul.f32 %v2296, 0.6931472
        %v2298 = vmul.f32 -0.5, %v1045
        %v2299 = vadd.f32 %v2298, 1.0
        %v2300 = vmul.f32 %v2299, %v1045
        %v2301 = vand.u32 2147483647, %v1045
        %vm2302 = vcmp.lt.f32.partialorder %v2301, 0.0004427343
        %v2303 = vsel %vm2302, %v2300, %v2297
        %v2304 = vadd.f32 %v1047, 1.0
        %v2305 = vlog2.pop %v2304
        %v2306 = vmul.f32 %v2305, 0.6931472
        %v2307 = vmul.f32 -0.5, %v1047
        %v2308 = vadd.f32 %v2307, 1.0
        %v2309 = vmul.f32 %v2308, %v1047
        %v2310 = vand.u32 2147483647, %v1047
        %vm2311 = vcmp.lt.f32.partialorder %v2310, 0.0004427343
        %v2312 = vsel %vm2311, %v2309, %v2306
        %v2313 = vadd.f32 %v1049, 1.0
        %v2314 = vlog2.pop %v2313
        %v2315 = vmul.f32 %v2314, 0.6931472
        %v2316 = vmul.f32 -0.5, %v1049
        %v2317 = vadd.f32 %v2316, 1.0
        %v2318 = vmul.f32 %v2317, %v1049
        %v2319 = vand.u32 2147483647, %v1049
        %vm2320 = vcmp.lt.f32.partialorder %v2319, 0.0004427343
        %v2321 = vsel %vm2320, %v2318, %v2315
        %v2322 = vadd.f32 %v1051, 1.0
        %v2323 = vlog2.pop %v2322
        %v2324 = vmul.f32 %v2323, 0.6931472
        %v2325 = vmul.f32 -0.5, %v1051
        %v2326 = vadd.f32 %v2325, 1.0
        %v2327 = vmul.f32 %v2326, %v1051
        %v2328 = vand.u32 2147483647, %v1051
        %vm2329 = vcmp.lt.f32.partialorder %v2328, 0.0004427343
        %v2330 = vsel %vm2329, %v2327, %v2324
        %v2331 = vadd.f32 %v1053, 1.0
        %v2332 = vlog2.pop %v2331
        %v2333 = vmul.f32 %v2332, 0.6931472
        %v2334 = vmul.f32 -0.5, %v1053
        %v2335 = vadd.f32 %v2334, 1.0
        %v2336 = vmul.f32 %v2335, %v1053
        %v2337 = vand.u32 2147483647, %v1053
        %vm2338 = vcmp.lt.f32.partialorder %v2337, 0.0004427343
        %v2339 = vsel %vm2338, %v2336, %v2333
        %v2340 = vadd.f32 %v1055, 1.0
        %v2341 = vlog2.pop %v2340
        %v2342 = vmul.f32 %v2341, 0.6931472
        %v2343 = vmul.f32 -0.5, %v1055
        %v2344 = vadd.f32 %v2343, 1.0
        %v2345 = vmul.f32 %v2344, %v1055
        %v2346 = vand.u32 2147483647, %v1055
        %vm2347 = vcmp.lt.f32.partialorder %v2346, 0.0004427343
        %v2348 = vsel %vm2347, %v2345, %v2342
        %v2349 = vadd.f32 %v1057, 1.0
        %v2350 = vlog2.pop %v2349
        %v2351 = vmul.f32 %v2350, 0.6931472
        %v2352 = vmul.f32 -0.5, %v1057
        %v2353 = vadd.f32 %v2352, 1.0
        %v2354 = vmul.f32 %v2353, %v1057
        %v2355 = vand.u32 2147483647, %v1057
        %vm2356 = vcmp.lt.f32.partialorder %v2355, 0.0004427343
        %v2357 = vsel %vm2356, %v2354, %v2351
        %v2358 = vadd.f32 %v1059, 1.0
        %v2359 = vlog2.pop %v2358
        %v2360 = vmul.f32 %v2359, 0.6931472
        %v2361 = vmul.f32 -0.5, %v1059
        %v2362 = vadd.f32 %v2361, 1.0
        %v2363 = vmul.f32 %v2362, %v1059
        %v2364 = vand.u32 2147483647, %v1059
        %vm2365 = vcmp.lt.f32.partialorder %v2364, 0.0004427343
        %v2366 = vsel %vm2365, %v2363, %v2360
        %v2367 = vadd.f32 %v1061, 1.0
        %v2368 = vlog2.pop %v2367
        %v2369 = vmul.f32 %v2368, 0.6931472
        %v2370 = vmul.f32 -0.5, %v1061
        %v2371 = vadd.f32 %v2370, 1.0
        %v2372 = vmul.f32 %v2371, %v1061
        %v2373 = vand.u32 2147483647, %v1061
        %vm2374 = vcmp.lt.f32.partialorder %v2373, 0.0004427343
        %v2375 = vsel %vm2374, %v2372, %v2369
        %v2376 = vadd.f32 %v1063, 1.0
        %v2377 = vlog2.pop %v2376
        %v2378 = vmul.f32 %v2377, 0.6931472
        %v2379 = vmul.f32 -0.5, %v1063
        %v2380 = vadd.f32 %v2379, 1.0
        %v2381 = vmul.f32 %v2380, %v1063
        %v2382 = vand.u32 2147483647, %v1063
        %vm2383 = vcmp.lt.f32.partialorder %v2382, 0.0004427343
        %v2384 = vsel %vm2383, %v2381, %v2378
        %v2385 = vadd.f32 %v1065, 1.0
        %v2386 = vlog2.pop %v2385
        %v2387 = vmul.f32 %v2386, 0.6931472
        %v2388 = vmul.f32 -0.5, %v1065
        %v2389 = vadd.f32 %v2388, 1.0
        %v2390 = vmul.f32 %v2389, %v1065
        %v2391 = vand.u32 2147483647, %v1065
        %vm2392 = vcmp.lt.f32.partialorder %v2391, 0.0004427343
        %v2393 = vsel %vm2392, %v2390, %v2387
        %v2394 = vadd.f32 %v1067, 1.0
        %v2395 = vlog2.pop %v2394
        %v2396 = vmul.f32 %v2395, 0.6931472
        %v2397 = vmul.f32 -0.5, %v1067
        %v2398 = vadd.f32 %v2397, 1.0
        %v2399 = vmul.f32 %v2398, %v1067
        %v2400 = vand.u32 2147483647, %v1067
        %vm2401 = vcmp.lt.f32.partialorder %v2400, 0.0004427343
        %v2402 = vsel %vm2401, %v2399, %v2396
        %v2403 = vadd.f32 %v1069, 1.0
        %v2404 = vlog2.pop %v2403
        %v2405 = vmul.f32 %v2404, 0.6931472
        %v2406 = vmul.f32 -0.5, %v1069
        %v2407 = vadd.f32 %v2406, 1.0
        %v2408 = vmul.f32 %v2407, %v1069
        %v2409 = vand.u32 2147483647, %v1069
        %vm2410 = vcmp.lt.f32.partialorder %v2409, 0.0004427343
        %v2411 = vsel %vm2410, %v2408, %v2405
        %v2412 = vadd.f32 %v1071, 1.0
        %v2413 = vlog2.pop %v2412
        %v2414 = vmul.f32 %v2413, 0.6931472
        %v2415 = vmul.f32 -0.5, %v1071
        %v2416 = vadd.f32 %v2415, 1.0
        %v2417 = vmul.f32 %v2416, %v1071
        %v2418 = vand.u32 2147483647, %v1071
        %vm2419 = vcmp.lt.f32.partialorder %v2418, 0.0004427343
        %v2420 = vsel %vm2419, %v2417, %v2414
        %v2421 = vadd.f32 %v1073, 1.0
        %v2422 = vlog2.pop %v2421
        %v2423 = vmul.f32 %v2422, 0.6931472
        %v2424 = vmul.f32 -0.5, %v1073
        %v2425 = vadd.f32 %v2424, 1.0
        %v2426 = vmul.f32 %v2425, %v1073
        %v2427 = vand.u32 2147483647, %v1073
        %vm2428 = vcmp.lt.f32.partialorder %v2427, 0.0004427343
        %v2429 = vsel %vm2428, %v2426, %v2423
        %v2430 = vadd.f32 %v1075, 1.0
        %v2431 = vlog2.pop %v2430
        %v2432 = vmul.f32 %v2431, 0.6931472
        %v2433 = vmul.f32 -0.5, %v1075
        %v2434 = vadd.f32 %v2433, 1.0
        %v2435 = vmul.f32 %v2434, %v1075
        %v2436 = vand.u32 2147483647, %v1075
        %vm2437 = vcmp.lt.f32.partialorder %v2436, 0.0004427343
        %v2438 = vsel %vm2437, %v2435, %v2432
        %v2439 = vadd.f32 %v1077, 1.0
        %v2440 = vlog2.pop %v2439
        %v2441 = vmul.f32 %v2440, 0.6931472
        %v2442 = vmul.f32 -0.5, %v1077
        %v2443 = vadd.f32 %v2442, 1.0
        %v2444 = vmul.f32 %v2443, %v1077
        %v2445 = vand.u32 2147483647, %v1077
        %vm2446 = vcmp.lt.f32.partialorder %v2445, 0.0004427343
        %v2447 = vsel %vm2446, %v2444, %v2441
        %v2448 = vadd.f32 %v1079, 1.0
        %v2449 = vlog2.pop %v2448
        %v2450 = vmul.f32 %v2449, 0.6931472
        %v2451 = vmul.f32 -0.5, %v1079
        %v2452 = vadd.f32 %v2451, 1.0
        %v2453 = vmul.f32 %v2452, %v1079
        %v2454 = vand.u32 2147483647, %v1079
        %vm2455 = vcmp.lt.f32.partialorder %v2454, 0.0004427343
        %v2456 = vsel %vm2455, %v2453, %v2450
        %v2457 = vadd.f32 %v1081, 1.0
        %v2458 = vlog2.pop %v2457
        %v2459 = vmul.f32 %v2458, 0.6931472
        %v2460 = vmul.f32 -0.5, %v1081
        %v2461 = vadd.f32 %v2460, 1.0
        %v2462 = vmul.f32 %v2461, %v1081
        %v2463 = vand.u32 2147483647, %v1081
        %vm2464 = vcmp.lt.f32.partialorder %v2463, 0.0004427343
        %v2465 = vsel %vm2464, %v2462, %v2459
        %v2466 = vadd.f32 %v1083, 1.0
        %v2467 = vlog2.pop %v2466
        %v2468 = vmul.f32 %v2467, 0.6931472
        %v2469 = vmul.f32 -0.5, %v1083
        %v2470 = vadd.f32 %v2469, 1.0
        %v2471 = vmul.f32 %v2470, %v1083
        %v2472 = vand.u32 2147483647, %v1083
        %vm2473 = vcmp.lt.f32.partialorder %v2472, 0.0004427343
        %v2474 = vsel %vm2473, %v2471, %v2468
        %v2475 = vadd.f32 %v1085, 1.0
        %v2476 = vlog2.pop %v2475
        %v2477 = vmul.f32 %v2476, 0.6931472
        %v2478 = vmul.f32 -0.5, %v1085
        %v2479 = vadd.f32 %v2478, 1.0
        %v2480 = vmul.f32 %v2479, %v1085
        %v2481 = vand.u32 2147483647, %v1085
        %vm2482 = vcmp.lt.f32.partialorder %v2481, 0.0004427343
        %v2483 = vsel %vm2482, %v2480, %v2477
        %v2484 = vadd.f32 %v1087, 1.0
        %v2485 = vlog2.pop %v2484
        %v2486 = vmul.f32 %v2485, 0.6931472
        %v2487 = vmul.f32 -0.5, %v1087
        %v2488 = vadd.f32 %v2487, 1.0
        %v2489 = vmul.f32 %v2488, %v1087
        %v2490 = vand.u32 2147483647, %v1087
        %vm2491 = vcmp.lt.f32.partialorder %v2490, 0.0004427343
        %v2492 = vsel %vm2491, %v2489, %v2486
        %v2493 = vadd.f32 %v1089, 1.0
        %v2494 = vlog2.pop %v2493
        %v2495 = vmul.f32 %v2494, 0.6931472
        %v2496 = vmul.f32 -0.5, %v1089
        %v2497 = vadd.f32 %v2496, 1.0
        %v2498 = vmul.f32 %v2497, %v1089
        %v2499 = vand.u32 2147483647, %v1089
        %vm2500 = vcmp.lt.f32.partialorder %v2499, 0.0004427343
        %v2501 = vsel %vm2500, %v2498, %v2495
        %v2502 = vadd.f32 %v1091, 1.0
        %v2503 = vlog2.pop %v2502
        %v2504 = vmul.f32 %v2503, 0.6931472
        %v2505 = vmul.f32 -0.5, %v1091
        %v2506 = vadd.f32 %v2505, 1.0
        %v2507 = vmul.f32 %v2506, %v1091
        %v2508 = vand.u32 2147483647, %v1091
        %vm2509 = vcmp.lt.f32.partialorder %v2508, 0.0004427343
        %v2510 = vsel %vm2509, %v2507, %v2504
        %v2511 = vadd.f32 %v1093, 1.0
        %v2512 = vlog2.pop %v2511
        %v2513 = vmul.f32 %v2512, 0.6931472
        %v2514 = vmul.f32 -0.5, %v1093
        %v2515 = vadd.f32 %v2514, 1.0
        %v2516 = vmul.f32 %v2515, %v1093
        %v2517 = vand.u32 2147483647, %v1093
        %vm2518 = vcmp.lt.f32.partialorder %v2517, 0.0004427343
        %v2519 = vsel %vm2518, %v2516, %v2513
        %v2520 = vadd.f32 %v1095, 1.0
        %v2521 = vlog2.pop %v2520
        %v2522 = vmul.f32 %v2521, 0.6931472
        %v2523 = vmul.f32 -0.5, %v1095
        %v2524 = vadd.f32 %v2523, 1.0
        %v2525 = vmul.f32 %v2524, %v1095
        %v2526 = vand.u32 2147483647, %v1095
        %vm2527 = vcmp.lt.f32.partialorder %v2526, 0.0004427343
        %v2528 = vsel %vm2527, %v2525, %v2522
        %v2529 = vadd.f32 %v1097, 1.0
        %v2530 = vlog2.pop %v2529
        %v2531 = vmul.f32 %v2530, 0.6931472
        %v2532 = vmul.f32 -0.5, %v1097
        %v2533 = vadd.f32 %v2532, 1.0
        %v2534 = vmul.f32 %v2533, %v1097
        %v2535 = vand.u32 2147483647, %v1097
        %vm2536 = vcmp.lt.f32.partialorder %v2535, 0.0004427343
        %v2537 = vsel %vm2536, %v2534, %v2531
        %v2538 = vadd.f32 %v298, %v1106
        %v2539 = vadd.f32 %v299, %v1115
        %v2540 = vadd.f32 %v300, %v1124
        %v2541 = vadd.f32 %v301, %v1133
        %v2542 = vadd.f32 %v302, %v1142
        %v2543 = vadd.f32 %v303, %v1151
        %v2544 = vadd.f32 %v304, %v1160
        %v2545 = vadd.f32 %v305, %v1169
        %v2546 = vadd.f32 %v306, %v1178
        %v2547 = vadd.f32 %v307, %v1187
        %v2548 = vadd.f32 %v308, %v1196
        %v2549 = vadd.f32 %v309, %v1205
        %v2550 = vadd.f32 %v310, %v1214
        %v2551 = vadd.f32 %v311, %v1223
        %v2552 = vadd.f32 %v312, %v1232
        %v2553 = vadd.f32 %v313, %v1241
        %v2554 = vadd.f32 %v314, %v1250
        %v2555 = vadd.f32 %v315, %v1259
        %v2556 = vadd.f32 %v316, %v1268
        %v2557 = vadd.f32 %v317, %v1277
        %v2558 = vadd.f32 %v318, %v1286
        %v2559 = vadd.f32 %v319, %v1295
        %v2560 = vadd.f32 %v320, %v1304
        %v2561 = vadd.f32 %v321, %v1313
        %v2562 = vadd.f32 %v322, %v1322
        %v2563 = vadd.f32 %v323, %v1331
        %v2564 = vadd.f32 %v324, %v1340
        %v2565 = vadd.f32 %v325, %v1349
        %v2566 = vadd.f32 %v326, %v1358
        %v2567 = vadd.f32 %v327, %v1367
        %v2568 = vadd.f32 %v328, %v1376
        %v2569 = vadd.f32 %v329, %v1385
        %v2570 = vadd.f32 %v330, %v1394
        %v2571 = vadd.f32 %v331, %v1403
        %v2572 = vadd.f32 %v332, %v1412
        %v2573 = vadd.f32 %v333, %v1421
        %v2574 = vadd.f32 %v334, %v1430
        %v2575 = vadd.f32 %v335, %v1439
        %v2576 = vadd.f32 %v336, %v1448
        %v2577 = vadd.f32 %v337, %v1457
        %v2578 = vadd.f32 %v338, %v1466
        %v2579 = vadd.f32 %v339, %v1475
        %v2580 = vadd.f32 %v340, %v1484
        %v2581 = vadd.f32 %v341, %v1493
        %v2582 = vadd.f32 %v342, %v1502
        %v2583 = vadd.f32 %v343, %v1511
        %v2584 = vadd.f32 %v344, %v1520
        %v2585 = vadd.f32 %v345, %v1529
        %v2586 = vadd.f32 %v346, %v1538
        %v2587 = vadd.f32 %v347, %v1547
        %v2588 = vadd.f32 %v348, %v1556
        %v2589 = vadd.f32 %v349, %v1565
        %v2590 = vadd.f32 %v350, %v1574
        %v2591 = vadd.f32 %v351, %v1583
        %v2592 = vadd.f32 %v352, %v1592
        %v2593 = vadd.f32 %v353, %v1601
        %v2594 = vadd.f32 %v354, %v1610
        %v2595 = vadd.f32 %v355, %v1619
        %v2596 = vadd.f32 %v356, %v1628
        %v2597 = vadd.f32 %v357, %v1637
        %v2598 = vadd.f32 %v358, %v1646
        %v2599 = vadd.f32 %v359, %v1655
        %v2600 = vadd.f32 %v360, %v1664
        %v2601 = vadd.f32 %v361, %v1673
        %v2602 = vadd.f32 %v362, %v1682
        %v2603 = vadd.f32 %v363, %v1691
        %v2604 = vadd.f32 %v364, %v1700
        %v2605 = vadd.f32 %v365, %v1709
        %v2606 = vadd.f32 %v366, %v1718
        %v2607 = vadd.f32 %v367, %v1727
        %v2608 = vadd.f32 %v368, %v1736
        %v2609 = vadd.f32 %v369, %v1745
        %v2610 = vadd.f32 %v370, %v1754
        %v2611 = vadd.f32 %v371, %v1763
        %v2612 = vadd.f32 %v372, %v1772
        %v2613 = vadd.f32 %v373, %v1781
        %v2614 = vadd.f32 %v374, %v1790
        %v2615 = vadd.f32 %v375, %v1799
        %v2616 = vadd.f32 %v376, %v1808
        %v2617 = vadd.f32 %v377, %v1817
        %v2618 = vadd.f32 %v378, %v1826
        %v2619 = vadd.f32 %v379, %v1835
        %v2620 = vadd.f32 %v380, %v1844
        %v2621 = vadd.f32 %v381, %v1853
        %v2622 = vadd.f32 %v382, %v1862
        %v2623 = vadd.f32 %v383, %v1871
        %v2624 = vadd.f32 %v384, %v1880
        %v2625 = vadd.f32 %v385, %v1889
        %v2626 = vadd.f32 %v386, %v1898
        %v2627 = vadd.f32 %v387, %v1907
        %v2628 = vadd.f32 %v388, %v1916
        %v2629 = vadd.f32 %v389, %v1925
        %v2630 = vadd.f32 %v390, %v1934
        %v2631 = vadd.f32 %v391, %v1943
        %v2632 = vadd.f32 %v392, %v1952
        %v2633 = vadd.f32 %v393, %v1961
        %v2634 = vadd.f32 %v394, %v1970
        %v2635 = vadd.f32 %v395, %v1979
        %v2636 = vadd.f32 %v396, %v1988
        %v2637 = vadd.f32 %v397, %v1997
        %v2638 = vadd.f32 %v398, %v2006
        %v2639 = vadd.f32 %v399, %v2015
        %v2640 = vadd.f32 %v400, %v2024
        %v2641 = vadd.f32 %v401, %v2033
        %v2642 = vadd.f32 %v402, %v2042
        %v2643 = vadd.f32 %v403, %v2051
        %v2644 = vadd.f32 %v404, %v2060
        %v2645 = vadd.f32 %v405, %v2069
        %v2646 = vadd.f32 %v406, %v2078
        %v2647 = vadd.f32 %v407, %v2087
        %v2648 = vadd.f32 %v408, %v2096
        %v2649 = vadd.f32 %v409, %v2105
        %v2650 = vadd.f32 %v410, %v2114
        %v2651 = vadd.f32 %v411, %v2123
        %v2652 = vadd.f32 %v412, %v2132
        %v2653 = vadd.f32 %v413, %v2141
        %v2654 = vadd.f32 %v414, %v2150
        %v2655 = vadd.f32 %v415, %v2159
        %v2656 = vadd.f32 %v416, %v2168
        %v2657 = vadd.f32 %v417, %v2177
        %v2658 = vadd.f32 %v418, %v2186
        %v2659 = vadd.f32 %v419, %v2195
        %v2660 = vadd.f32 %v420, %v2204
        %v2661 = vadd.f32 %v421, %v2213
        %v2662 = vadd.f32 %v422, %v2222
        %v2663 = vadd.f32 %v423, %v2231
        %v2664 = vadd.f32 %v424, %v2240
        %v2665 = vadd.f32 %v425, %v2249
        %v2666 = vadd.f32 %v426, %v2258
        %v2667 = vadd.f32 %v427, %v2267
        %v2668 = vadd.f32 %v428, %v2276
        %v2669 = vadd.f32 %v429, %v2285
        %v2670 = vadd.f32 %v430, %v2294
        %v2671 = vadd.f32 %v431, %v2303
        %v2672 = vadd.f32 %v432, %v2312
        %v2673 = vadd.f32 %v433, %v2321
        %v2674 = vadd.f32 %v434, %v2330
        %v2675 = vadd.f32 %v435, %v2339
        %v2676 = vadd.f32 %v436, %v2348
        %v2677 = vadd.f32 %v437, %v2357
        %v2678 = vadd.f32 %v438, %v2366
        %v2679 = vadd.f32 %v439, %v2375
        %v2680 = vadd.f32 %v440, %v2384
        %v2681 = vadd.f32 %v441, %v2393
        %v2682 = vadd.f32 %v442, %v2402
        %v2683 = vadd.f32 %v443, %v2411
        %v2684 = vadd.f32 %v444, %v2420
        %v2685 = vadd.f32 %v445, %v2429
        %v2686 = vadd.f32 %v446, %v2438
        %v2687 = vadd.f32 %v447, %v2447
        %v2688 = vadd.f32 %v448, %v2456
        %v2689 = vadd.f32 %v449, %v2465
        %v2690 = vadd.f32 %v450, %v2474
        %v2691 = vadd.f32 %v451, %v2483
        %v2692 = vadd.f32 %v452, %v2492
        %v2693 = vadd.f32 %v453, %v2501
        %v2694 = vadd.f32 %v454, %v2510
        %v2695 = vadd.f32 %v455, %v2519
        %v2696 = vadd.f32 %v456, %v2528
        %v2697 = vadd.f32 %v457, %v2537
        %v2698 = vadd.f32 %v2538, 0.001
        %v2699 = vadd.f32 %v2539, 0.001
        %v2700 = vadd.f32 %v2540, 0.001
        %v2701 = vadd.f32 %v2541, 0.001
        %v2702 = vadd.f32 %v2542, 0.001
        %v2703 = vadd.f32 %v2543, 0.001
        %v2704 = vadd.f32 %v2544, 0.001
        %v2705 = vadd.f32 %v2545, 0.001
        %v2706 = vadd.f32 %v2546, 0.001
        %v2707 = vadd.f32 %v2547, 0.001
        %v2708 = vadd.f32 %v2548, 0.001
        %v2709 = vadd.f32 %v2549, 0.001
        %v2710 = vadd.f32 %v2550, 0.001
        %v2711 = vadd.f32 %v2551, 0.001
        %v2712 = vadd.f32 %v2552, 0.001
        %v2713 = vadd.f32 %v2553, 0.001
        %v2714 = vadd.f32 %v2554, 0.001
        %v2715 = vadd.f32 %v2555, 0.001
        %v2716 = vadd.f32 %v2556, 0.001
        %v2717 = vadd.f32 %v2557, 0.001
        %v2718 = vadd.f32 %v2558, 0.001
        %v2719 = vadd.f32 %v2559, 0.001
        %v2720 = vadd.f32 %v2560, 0.001
        %v2721 = vadd.f32 %v2561, 0.001
        %v2722 = vadd.f32 %v2562, 0.001
        %v2723 = vadd.f32 %v2563, 0.001
        %v2724 = vadd.f32 %v2564, 0.001
        %v2725 = vadd.f32 %v2565, 0.001
        %v2726 = vadd.f32 %v2566, 0.001
        %v2727 = vadd.f32 %v2567, 0.001
        %v2728 = vadd.f32 %v2568, 0.001
        %v2729 = vadd.f32 %v2569, 0.001
        %v2730 = vadd.f32 %v2570, 0.001
        %v2731 = vadd.f32 %v2571, 0.001
        %v2732 = vadd.f32 %v2572, 0.001
        %v2733 = vadd.f32 %v2573, 0.001
        %v2734 = vadd.f32 %v2574, 0.001
        %v2735 = vadd.f32 %v2575, 0.001
        %v2736 = vadd.f32 %v2576, 0.001
        %v2737 = vadd.f32 %v2577, 0.001
        %v2738 = vadd.f32 %v2578, 0.001
        %v2739 = vadd.f32 %v2579, 0.001
        %v2740 = vadd.f32 %v2580, 0.001
        %v2741 = vadd.f32 %v2581, 0.001
        %v2742 = vadd.f32 %v2582, 0.001
        %v2743 = vadd.f32 %v2583, 0.001
        %v2744 = vadd.f32 %v2584, 0.001
        %v2745 = vadd.f32 %v2585, 0.001
        %v2746 = vadd.f32 %v2586, 0.001
        %v2747 = vadd.f32 %v2587, 0.001
        %v2748 = vadd.f32 %v2588, 0.001
        %v2749 = vadd.f32 %v2589, 0.001
        %v2750 = vadd.f32 %v2590, 0.001
        %v2751 = vadd.f32 %v2591, 0.001
        %v2752 = vadd.f32 %v2592, 0.001
        %v2753 = vadd.f32 %v2593, 0.001
        %v2754 = vadd.f32 %v2594, 0.001
        %v2755 = vadd.f32 %v2595, 0.001
        %v2756 = vadd.f32 %v2596, 0.001
        %v2757 = vadd.f32 %v2597, 0.001
        %v2758 = vadd.f32 %v2598, 0.001
        %v2759 = vadd.f32 %v2599, 0.001
        %v2760 = vadd.f32 %v2600, 0.001
        %v2761 = vadd.f32 %v2601, 0.001
        %v2762 = vadd.f32 %v2602, 0.001
        %v2763 = vadd.f32 %v2603, 0.001
        %v2764 = vadd.f32 %v2604, 0.001
        %v2765 = vadd.f32 %v2605, 0.001
        %v2766 = vadd.f32 %v2606, 0.001
        %v2767 = vadd.f32 %v2607, 0.001
        %v2768 = vadd.f32 %v2608, 0.001
        %v2769 = vadd.f32 %v2609, 0.001
        %v2770 = vadd.f32 %v2610, 0.001
        %v2771 = vadd.f32 %v2611, 0.001
        %v2772 = vadd.f32 %v2612, 0.001
        %v2773 = vadd.f32 %v2613, 0.001
        %v2774 = vadd.f32 %v2614, 0.001
        %v2775 = vadd.f32 %v2615, 0.001
        %v2776 = vadd.f32 %v2616, 0.001
        %v2777 = vadd.f32 %v2617, 0.001
        %v2778 = vadd.f32 %v2618, 0.001
        %v2779 = vadd.f32 %v2619, 0.001
        %v2780 = vadd.f32 %v2620, 0.001
        %v2781 = vadd.f32 %v2621, 0.001
        %v2782 = vadd.f32 %v2622, 0.001
        %v2783 = vadd.f32 %v2623, 0.001
        %v2784 = vadd.f32 %v2624, 0.001
        %v2785 = vadd.f32 %v2625, 0.001
        %v2786 = vadd.f32 %v2626, 0.001
        %v2787 = vadd.f32 %v2627, 0.001
        %v2788 = vadd.f32 %v2628, 0.001
        %v2789 = vadd.f32 %v2629, 0.001
        %v2790 = vadd.f32 %v2630, 0.001
        %v2791 = vadd.f32 %v2631, 0.001
        %v2792 = vadd.f32 %v2632, 0.001
        %v2793 = vadd.f32 %v2633, 0.001
        %v2794 = vadd.f32 %v2634, 0.001
        %v2795 = vadd.f32 %v2635, 0.001
        %v2796 = vadd.f32 %v2636, 0.001
        %v2797 = vadd.f32 %v2637, 0.001
        %v2798 = vadd.f32 %v2638, 0.001
        %v2799 = vadd.f32 %v2639, 0.001
        %v2800 = vadd.f32 %v2640, 0.001
        %v2801 = vadd.f32 %v2641, 0.001
        %v2802 = vadd.f32 %v2642, 0.001
        %v2803 = vadd.f32 %v2643, 0.001
        %v2804 = vadd.f32 %v2644, 0.001
        %v2805 = vadd.f32 %v2645, 0.001
        %v2806 = vadd.f32 %v2646, 0.001
        %v2807 = vadd.f32 %v2647, 0.001
        %v2808 = vadd.f32 %v2648, 0.001
        %v2809 = vadd.f32 %v2649, 0.001
        %v2810 = vadd.f32 %v2650, 0.001
        %v2811 = vadd.f32 %v2651, 0.001
        %v2812 = vadd.f32 %v2652, 0.001
        %v2813 = vadd.f32 %v2653, 0.001
        %v2814 = vadd.f32 %v2654, 0.001
        %v2815 = vadd.f32 %v2655, 0.001
        %v2816 = vadd.f32 %v2656, 0.001
        %v2817 = vadd.f32 %v2657, 0.001
        %v2818 = vadd.f32 %v2658, 0.001
        %v2819 = vadd.f32 %v2659, 0.001
        %v2820 = vadd.f32 %v2660, 0.001
        %v2821 = vadd.f32 %v2661, 0.001
        %v2822 = vadd.f32 %v2662, 0.001
        %v2823 = vadd.f32 %v2663, 0.001
        %v2824 = vadd.f32 %v2664, 0.001
        %v2825 = vadd.f32 %v2665, 0.001
        %v2826 = vadd.f32 %v2666, 0.001
        %v2827 = vadd.f32 %v2667, 0.001
        %v2828 = vadd.f32 %v2668, 0.001
        %v2829 = vadd.f32 %v2669, 0.001
        %v2830 = vadd.f32 %v2670, 0.001
        %v2831 = vadd.f32 %v2671, 0.001
        %v2832 = vadd.f32 %v2672, 0.001
        %v2833 = vadd.f32 %v2673, 0.001
        %v2834 = vadd.f32 %v2674, 0.001
        %v2835 = vadd.f32 %v2675, 0.001
        %v2836 = vadd.f32 %v2676, 0.001
        %v2837 = vadd.f32 %v2677, 0.001
        %v2838 = vadd.f32 %v2678, 0.001
        %v2839 = vadd.f32 %v2679, 0.001
        %v2840 = vadd.f32 %v2680, 0.001
        %v2841 = vadd.f32 %v2681, 0.001
        %v2842 = vadd.f32 %v2682, 0.001
        %v2843 = vadd.f32 %v2683, 0.001
        %v2844 = vadd.f32 %v2684, 0.001
        %v2845 = vadd.f32 %v2685, 0.001
        %v2846 = vadd.f32 %v2686, 0.001
        %v2847 = vadd.f32 %v2687, 0.001
        %v2848 = vadd.f32 %v2688, 0.001
        %v2849 = vadd.f32 %v2689, 0.001
        %v2850 = vadd.f32 %v2690, 0.001
        %v2851 = vadd.f32 %v2691, 0.001
        %v2852 = vadd.f32 %v2692, 0.001
        %v2853 = vadd.f32 %v2693, 0.001
        %v2854 = vadd.f32 %v2694, 0.001
        %v2855 = vadd.f32 %v2695, 0.001
        %v2856 = vadd.f32 %v2696, 0.001
        %v2857 = vadd.f32 %v2697, 0.001
        %2858 = vst [vmem:[%s135] sm:$0xff] %v2698
        %2859 = vst [vmem:[%s135 + $0x8] sm:$0xff] %v2699
        %2860 = vst [vmem:[%s135 + $0x10] sm:$0xff] %v2700
        %2861 = vst [vmem:[%s135 + $0x18] sm:$0xff] %v2701
        %2862 = vst [vmem:[%s135 + $0x20] sm:$0xff] %v2702
        %2863 = vst [vmem:[%s135 + $0x28] sm:$0xff] %v2703
        %2864 = vst [vmem:[%s135 + $0x30] sm:$0xff] %v2704
        %2865 = vst [vmem:[%s135 + $0x38] sm:$0xff] %v2705
        %2866 = vst [vmem:[%s135 + $0x40] sm:$0xff] %v2706
        %2867 = vst [vmem:[%s135 + $0x48] sm:$0xff] %v2707
        %2868 = vst [vmem:[%s135 + $0x50] sm:$0xff] %v2708
        %2869 = vst [vmem:[%s135 + $0x58] sm:$0xff] %v2709
        %2870 = vst [vmem:[%s135 + $0x60] sm:$0xff] %v2710
        %2871 = vst [vmem:[%s135 + $0x68] sm:$0xff] %v2711
        %2872 = vst [vmem:[%s135 + $0x70] sm:$0xff] %v2712
        %2873 = vst [vmem:[%s135 + $0x78] sm:$0xff] %v2713
        %2874 = vst [vmem:[%s135 + $0x80] sm:$0xff] %v2714
        %2875 = vst [vmem:[%s135 + $0x88] sm:$0xff] %v2715
        %2876 = vst [vmem:[%s135 + $0x90] sm:$0xff] %v2716
        %2877 = vst [vmem:[%s135 + $0x98] sm:$0xff] %v2717
        %2878 = vst [vmem:[%s135 + $0xa0] sm:$0xff] %v2718
        %2879 = vst [vmem:[%s135 + $0xa8] sm:$0xff] %v2719
        %2880 = vst [vmem:[%s135 + $0xb0] sm:$0xff] %v2720
        %2881 = vst [vmem:[%s135 + $0xb8] sm:$0xff] %v2721
        %2882 = vst [vmem:[%s135 + $0xc0] sm:$0xff] %v2722
        %2883 = vst [vmem:[%s135 + $0xc8] sm:$0xff] %v2723
        %2884 = vst [vmem:[%s135 + $0xd0] sm:$0xff] %v2724
        %2885 = vst [vmem:[%s135 + $0xd8] sm:$0xff] %v2725
        %2886 = vst [vmem:[%s135 + $0xe0] sm:$0xff] %v2726
        %2887 = vst [vmem:[%s135 + $0xe8] sm:$0xff] %v2727
        %2888 = vst [vmem:[%s135 + $0xf0] sm:$0xff] %v2728
        %2889 = vst [vmem:[%s135 + $0xf8] sm:$0xff] %v2729
        %2890 = vst [vmem:[%s135 + $0x100] sm:$0xff] %v2730
        %2891 = vst [vmem:[%s135 + $0x108] sm:$0xff] %v2731
        %2892 = vst [vmem:[%s135 + $0x110] sm:$0xff] %v2732
        %2893 = vst [vmem:[%s135 + $0x118] sm:$0xff] %v2733
        %2894 = vst [vmem:[%s135 + $0x120] sm:$0xff] %v2734
        %2895 = vst [vmem:[%s135 + $0x128] sm:$0xff] %v2735
        %2896 = vst [vmem:[%s135 + $0x130] sm:$0xff] %v2736
        %2897 = vst [vmem:[%s135 + $0x138] sm:$0xff] %v2737
        %2898 = vst [vmem:[%s135 + $0x140] sm:$0xff] %v2738
        %2899 = vst [vmem:[%s135 + $0x148] sm:$0xff] %v2739
        %2900 = vst [vmem:[%s135 + $0x150] sm:$0xff] %v2740
        %2901 = vst [vmem:[%s135 + $0x158] sm:$0xff] %v2741
        %2902 = vst [vmem:[%s135 + $0x160] sm:$0xff] %v2742
        %2903 = vst [vmem:[%s135 + $0x168] sm:$0xff] %v2743
        %2904 = vst [vmem:[%s135 + $0x170] sm:$0xff] %v2744
        %2905 = vst [vmem:[%s135 + $0x178] sm:$0xff] %v2745
        %2906 = vst [vmem:[%s135 + $0x180] sm:$0xff] %v2746
        %2907 = vst [vmem:[%s135 + $0x188] sm:$0xff] %v2747
        %2908 = vst [vmem:[%s135 + $0x190] sm:$0xff] %v2748
        %2909 = vst [vmem:[%s135 + $0x198] sm:$0xff] %v2749
        %2910 = vst [vmem:[%s135 + $0x1a0] sm:$0xff] %v2750
        %2911 = vst [vmem:[%s135 + $0x1a8] sm:$0xff] %v2751
        %2912 = vst [vmem:[%s135 + $0x1b0] sm:$0xff] %v2752
        %2913 = vst [vmem:[%s135 + $0x1b8] sm:$0xff] %v2753
        %2914 = vst [vmem:[%s135 + $0x1c0] sm:$0xff] %v2754
        %2915 = vst [vmem:[%s135 + $0x1c8] sm:$0xff] %v2755
        %2916 = vst [vmem:[%s135 + $0x1d0] sm:$0xff] %v2756
        %2917 = vst [vmem:[%s135 + $0x1d8] sm:$0xff] %v2757
        %2918 = vst [vmem:[%s135 + $0x1e0] sm:$0xff] %v2758
        %2919 = vst [vmem:[%s135 + $0x1e8] sm:$0xff] %v2759
        %2920 = vst [vmem:[%s135 + $0x1f0] sm:$0xff] %v2760
        %2921 = vst [vmem:[%s135 + $0x1f8] sm:$0xff] %v2761
        %2922 = vst [vmem:[%s135 + $0x200] sm:$0xff] %v2762
        %2923 = vst [vmem:[%s135 + $0x208] sm:$0xff] %v2763
        %2924 = vst [vmem:[%s135 + $0x210] sm:$0xff] %v2764
        %2925 = vst [vmem:[%s135 + $0x218] sm:$0xff] %v2765
        %2926 = vst [vmem:[%s135 + $0x220] sm:$0xff] %v2766
        %2927 = vst [vmem:[%s135 + $0x228] sm:$0xff] %v2767
        %2928 = vst [vmem:[%s135 + $0x230] sm:$0xff] %v2768
        %2929 = vst [vmem:[%s135 + $0x238] sm:$0xff] %v2769
        %2930 = vst [vmem:[%s135 + $0x240] sm:$0xff] %v2770
        %2931 = vst [vmem:[%s135 + $0x248] sm:$0xff] %v2771
        %2932 = vst [vmem:[%s135 + $0x250] sm:$0xff] %v2772
        %2933 = vst [vmem:[%s135 + $0x258] sm:$0xff] %v2773
        %2934 = vst [vmem:[%s135 + $0x260] sm:$0xff] %v2774
        %2935 = vst [vmem:[%s135 + $0x268] sm:$0xff] %v2775
        %2936 = vst [vmem:[%s135 + $0x270] sm:$0xff] %v2776
        %2937 = vst [vmem:[%s135 + $0x278] sm:$0xff] %v2777
        %2938 = vst [vmem:[%s135 + $0x280] sm:$0xff] %v2778
        %2939 = vst [vmem:[%s135 + $0x288] sm:$0xff] %v2779
        %2940 = vst [vmem:[%s135 + $0x290] sm:$0xff] %v2780
        %2941 = vst [vmem:[%s135 + $0x298] sm:$0xff] %v2781
        %2942 = vst [vmem:[%s135 + $0x2a0] sm:$0xff] %v2782
        %2943 = vst [vmem:[%s135 + $0x2a8] sm:$0xff] %v2783
        %2944 = vst [vmem:[%s135 + $0x2b0] sm:$0xff] %v2784
        %2945 = vst [vmem:[%s135 + $0x2b8] sm:$0xff] %v2785
        %2946 = vst [vmem:[%s135 + $0x2c0] sm:$0xff] %v2786
        %2947 = vst [vmem:[%s135 + $0x2c8] sm:$0xff] %v2787
        %2948 = vst [vmem:[%s135 + $0x2d0] sm:$0xff] %v2788
        %2949 = vst [vmem:[%s135 + $0x2d8] sm:$0xff] %v2789
        %2950 = vst [vmem:[%s135 + $0x2e0] sm:$0xff] %v2790
        %2951 = vst [vmem:[%s135 + $0x2e8] sm:$0xff] %v2791
        %2952 = vst [vmem:[%s135 + $0x2f0] sm:$0xff] %v2792
        %2953 = vst [vmem:[%s135 + $0x2f8] sm:$0xff] %v2793
        %2954 = vst [vmem:[%s135 + $0x300] sm:$0xff] %v2794
        %2955 = vst [vmem:[%s135 + $0x308] sm:$0xff] %v2795
        %2956 = vst [vmem:[%s135 + $0x310] sm:$0xff] %v2796
        %2957 = vst [vmem:[%s135 + $0x318] sm:$0xff] %v2797
        %2958 = vst [vmem:[%s135 + $0x320] sm:$0xff] %v2798
        %2959 = vst [vmem:[%s135 + $0x328] sm:$0xff] %v2799
        %2960 = vst [vmem:[%s135 + $0x330] sm:$0xff] %v2800
        %2961 = vst [vmem:[%s135 + $0x338] sm:$0xff] %v2801
        %2962 = vst [vmem:[%s135 + $0x340] sm:$0xff] %v2802
        %2963 = vst [vmem:[%s135 + $0x348] sm:$0xff] %v2803
        %2964 = vst [vmem:[%s135 + $0x350] sm:$0xff] %v2804
        %2965 = vst [vmem:[%s135 + $0x358] sm:$0xff] %v2805
        %2966 = vst [vmem:[%s135 + $0x360] sm:$0xff] %v2806
        %2967 = vst [vmem:[%s135 + $0x368] sm:$0xff] %v2807
        %2968 = vst [vmem:[%s135 + $0x370] sm:$0xff] %v2808
        %2969 = vst [vmem:[%s135 + $0x378] sm:$0xff] %v2809
        %2970 = vst [vmem:[%s135 + $0x380] sm:$0xff] %v2810
        %2971 = vst [vmem:[%s135 + $0x388] sm:$0xff] %v2811
        %2972 = vst [vmem:[%s135 + $0x390] sm:$0xff] %v2812
        %2973 = vst [vmem:[%s135 + $0x398] sm:$0xff] %v2813
        %2974 = vst [vmem:[%s135 + $0x3a0] sm:$0xff] %v2814
        %2975 = vst [vmem:[%s135 + $0x3a8] sm:$0xff] %v2815
        %2976 = vst [vmem:[%s135 + $0x3b0] sm:$0xff] %v2816
        %2977 = vst [vmem:[%s135 + $0x3b8] sm:$0xff] %v2817
        %2978 = vst [vmem:[%s135 + $0x3c0] sm:$0xff] %v2818
        %2979 = vst [vmem:[%s135 + $0x3c8] sm:$0xff] %v2819
        %2980 = vst [vmem:[%s135 + $0x3d0] sm:$0xff] %v2820
        %2981 = vst [vmem:[%s135 + $0x3d8] sm:$0xff] %v2821
        %2982 = vst [vmem:[%s135 + $0x3e0] sm:$0xff] %v2822
        %2983 = vst [vmem:[%s135 + $0x3e8] sm:$0xff] %v2823
        %2984 = vst [vmem:[%s135 + $0x3f0] sm:$0xff] %v2824
        %2985 = vst [vmem:[%s135 + $0x3f8] sm:$0xff] %v2825
        %2986 = vst [vmem:[%s135 + $0x400] sm:$0xff] %v2826
        %2987 = vst [vmem:[%s135 + $0x408] sm:$0xff] %v2827
        %2988 = vst [vmem:[%s135 + $0x410] sm:$0xff] %v2828
        %2989 = vst [vmem:[%s135 + $0x418] sm:$0xff] %v2829
        %2990 = vst [vmem:[%s135 + $0x420] sm:$0xff] %v2830
        %2991 = vst [vmem:[%s135 + $0x428] sm:$0xff] %v2831
        %2992 = vst [vmem:[%s135 + $0x430] sm:$0xff] %v2832
        %2993 = vst [vmem:[%s135 + $0x438] sm:$0xff] %v2833
        %2994 = vst [vmem:[%s135 + $0x440] sm:$0xff] %v2834
        %2995 = vst [vmem:[%s135 + $0x448] sm:$0xff] %v2835
        %2996 = vst [vmem:[%s135 + $0x450] sm:$0xff] %v2836
        %2997 = vst [vmem:[%s135 + $0x458] sm:$0xff] %v2837
        %2998 = vst [vmem:[%s135 + $0x460] sm:$0xff] %v2838
        %2999 = vst [vmem:[%s135 + $0x468] sm:$0xff] %v2839
        %3000 = vst [vmem:[%s135 + $0x470] sm:$0xff] %v2840
        %3001 = vst [vmem:[%s135 + $0x478] sm:$0xff] %v2841
        %3002 = vst [vmem:[%s135 + $0x480] sm:$0xff] %v2842
        %3003 = vst [vmem:[%s135 + $0x488] sm:$0xff] %v2843
        %3004 = vst [vmem:[%s135 + $0x490] sm:$0xff] %v2844
        %3005 = vst [vmem:[%s135 + $0x498] sm:$0xff] %v2845
        %3006 = vst [vmem:[%s135 + $0x4a0] sm:$0xff] %v2846
        %3007 = vst [vmem:[%s135 + $0x4a8] sm:$0xff] %v2847
        %3008 = vst [vmem:[%s135 + $0x4b0] sm:$0xff] %v2848
        %3009 = vst [vmem:[%s135 + $0x4b8] sm:$0xff] %v2849
        %3010 = vst [vmem:[%s135 + $0x4c0] sm:$0xff] %v2850
        %3011 = vst [vmem:[%s135 + $0x4c8] sm:$0xff] %v2851
        %3012 = vst [vmem:[%s135 + $0x4d0] sm:$0xff] %v2852
        %3013 = vst [vmem:[%s135 + $0x4d8] sm:$0xff] %v2853
        %3014 = vst [vmem:[%s135 + $0x4e0] sm:$0xff] %v2854
        %3015 = vst [vmem:[%s135 + $0x4e8] sm:$0xff] %v2855
        %3016 = vst [vmem:[%s135 + $0x4f0] sm:$0xff] %v2856
        %3017 = vst [vmem:[%s135 + $0x4f8] sm:$0xff] %v2857
        %s3018 = sand.u32 %s52, 1
        %s3019 = scalar_lea.sflag [#allocation4], %s3018
        %s3020 = sand.u32 %s52, 1
        %s3021 = smul.addr %s3020, 1280
        %s3022 = scalar_lea.vmem [#allocation5], %s3021
        // Predicated region
        $region29: #{tpu_custom_call.1} parent=23 // pred_check
          %p3023 = pneg %p62
        $region30: #{tpu_custom_call.1} parent=23 // pred_check_branch
          %3025 = sbr.rel (%p3023) target = $region32
        $region31: #{tpu_custom_call.1} parent=23 // pred_region
          %s3026 = smul.u32 20, %s18
          %s3028 = ssub.s32 20480, 20480
          %3029 = vsyncadd %s3019, %s3028
          %s3030 = smul.addr %s3026, 8
          %s3031 = smul.addr %s3030, 128
          %s3032 = scalar_lea.hbm %s1, %s3031
          %s3033 = sshll.u32 %s3022, 4
          %s3034 = int_to_ptr.vmem [resolvable:$true] %s3033
          %3039 = dma.vmem_to_hbm [thread:$0]  %s3034, 20480, %s3032, %s3019, 1024, 1024, 64
        $region32: #{tpu_custom_call.1} parent=23 // pred_fallthru
          _
      $region24: #{tpu_custom_call.1} parent=5 // pred_fallthru
        _
      %p3040 = scmp.le.s32.totalorder 2, %s13
      // Predicated region
      $region33: #{tpu_custom_call.1} parent=5 // pred_check
        %p3041 = pneg %p3040
      $region34: #{tpu_custom_call.1} parent=5 // pred_check_branch
        %3043 = sbr.rel (%p3041) target = $region36
      $region35: #{tpu_custom_call.1} parent=5 // pred_region
        %s3044 = ssub.s32 %s13, 2
        // Predicated region
        $region37: #{tpu_custom_call.1} parent=35 // pred_check
          %p3045 = pneg %p68
        $region38: #{tpu_custom_call.1} parent=35 // pred_check_branch
          %3047 = sbr.rel (%p3045) target = $region40
        $region39: #{tpu_custom_call.1} parent=35 // pred_region
          %s3048 = sand.u32 %s53, 1
          %s3049 = scalar_lea.sflag [#allocation4], %s3048
          %s3050 = sand.u32 %s53, 1
          %s3051 = smul.addr %s3050, 1280
          %s3052 = scalar_lea.vmem [#allocation5], %s3051
          %3053 = dma.done %s3049, 20480
        $region40: #{tpu_custom_call.1} parent=35 // pred_fallthru
          _
      $region36: #{tpu_custom_call.1} parent=5 // pred_fallthru
        _
    $region6: #{tpu_custom_call.1} parent=1 // loop_footer
      %s17 = sadd.s32 1, %s13
    $region7: #{tpu_custom_call.1} parent=1 // loop_footer_branch
      %12 = sbr.rel target = $region3
    $region8: #{tpu_custom_call.1} parent=1 // loop_exit
      _
    %3054 = vsyncpa [#allocation3], 1
    %s3055 = scalar_lea.sflag [#allocation3], 1
    %3056 = vsyncpa %s3055, 1
    %3057 = vsyncpa [#allocation4], 1
    %s3058 = scalar_lea.sflag [#allocation4], 1
    %3059 = vsyncpa %s3058, 1

</llo_original>
